<compile_context>
chip_gen: v5e
topology: v5e:2x2
jax: 0.10.0
libtpu: 0.0.40
codegen_flags: <defaults>
</compile_context>

<pallas_src>
import jax
import jax.numpy as jnp
from jax.experimental import pallas as pl
from jax.experimental.pallas import tpu as pltpu


def _round_up(x, m):
    return ((x + m - 1) // m) * m


def _build_kernel(plan, num_layers, alpha):
    """plan: per-layer dicts of static ref indices / compute modes."""

    def kernel(*refs):
        out_ref = refs[-1]
        phases = refs[0][...]                       # (1, tile_P) f32
        h = phases                                  # running activation, f32 (C, tile_P)
        for li, cfg in enumerate(plan):
            w_feat = refs[cfg["w_feat"]][...]
            bias = refs[cfg["bias"]][...]           # (Cout, 1) f32

            mode = cfg["feat_mode"]
            if mode == "bcast":                     # Cin_feat == 1: outer product on VPU
                acc = w_feat * h                    # (Cout,1)*(1,P) -> (Cout,P) f32
            elif mode == "reduce":                  # Cout == 1: weighted sublane reduce
                acc = jnp.sum(w_feat * h, axis=0, keepdims=True)
            else:                                   # "dot": bf16 MXU matmul, f32 accum
                acc = jnp.dot(w_feat, h.astype(jnp.bfloat16),
                              preferred_element_type=jnp.float32)

            if cfg["lat_idx"] is not None:
                lat = refs[cfg["lat_idx"]][...]     # (lat_n, tile_P) bf16
                w_lat = refs[cfg["w_lat"]][...]
                if cfg["lat_dot"]:
                    acc = acc + jnp.dot(w_lat, lat,
                                        preferred_element_type=jnp.float32)
                else:                               # tiny K: unrolled f32 MACs (VPU)
                    lat_f = lat.astype(jnp.float32)
                    for j in range(cfg["lat_n"]):
                        acc = acc + w_lat[:, j:j + 1] * lat_f[j:j + 1, :]

            acc = acc + bias
            if li < num_layers - 1:                 # LeakyReLU(0.2): one mul + one max
                acc = jnp.maximum(acc, alpha * acc)
            h = acc

        # fused residual, lane-dense (1, tile_P) store
        out_ref[...] = (phases - h).astype(out_ref.dtype)

    return kernel


def latent_coded_mlp_forward(phases, latent_codes, weights, biases,
                             num_latent_codes, *, alpha=0.2, tile_pixels=2048):
    """Pallas TPU forward of LatentCodedMLP.

    phases:        (N, 1, H, W) float32
    latent_codes:  (N, L, H, W) float32 or None, L == sum(num_latent_codes)
    weights[i]:    (Cout_i, Cin_i)  (squeezed 1x1 conv weight (Cout, Cin, 1, 1))
    biases[i]:     (Cout_i,)
    Returns phases - MLP(phases, latent_codes), shape (N, 1, H, W).
    """
    num_layers = len(weights)
    n, c, hh, ww = phases.shape
    assert c == 1, "phases must have a single channel"
    if latent_codes is None:
        num_latent_codes = [0] * num_layers
    assert len(num_latent_codes) == num_layers
    idxs = [sum(num_latent_codes[:y]) for y in range(num_layers + 1)]

    f32, bf16 = jnp.float32, jnp.bfloat16

    p_total = n * hh * ww
    tile = min(int(tile_pixels), _round_up(p_total, 128))
    p_pad = _round_up(p_total, tile)
    grid = (p_pad // tile,)

    # ---- one-time layout in XLA: pixels on the lane axis --------------------
    phases_lp = phases.reshape(1, p_total).astype(f32)
    if p_pad > p_total:
        phases_lp = jnp.pad(phases_lp, ((0, 0), (0, p_pad - p_total)))

    lat_lp = None
    if latent_codes is not None and sum(num_latent_codes) > 0:
        l_total = latent_codes.shape[1]
        lat_lp = jnp.transpose(latent_codes, (1, 0, 2, 3)).reshape(l_total, p_total)
        if p_pad > p_total:
            lat_lp = jnp.pad(lat_lp, ((0, 0), (0, p_pad - p_total)))
        lat_lp = lat_lp.astype(f32)

    # ---- assemble kernel operands + BlockSpecs -------------------------------
    def _stream_spec(rows):      # per-pixel-tile streaming operand
        return pl.BlockSpec((rows, tile), lambda i: (0, i))

    def _resident_spec(shape):   # constant index_map -> DMA'd once, stays in VMEM
        return pl.BlockSpec(shape, lambda i: (0, 0))

    inputs = [phases_lp]
    in_specs = [_stream_spec(1)]
    plan = []

    for li in range(num_layers):
        w = jnp.asarray(weights[li], f32)
        b = jnp.asarray(biases[li], f32)
        lat_n = int(num_latent_codes[li])
        cout, cin_tot = w.shape
        cin_feat = cin_tot - lat_n
        cfg = {"lat_idx": None, "w_lat": None, "lat_n": lat_n, "lat_dot": False}

        # streamed latent slab for this layer (bf16 halves HBM bytes)
        if lat_n > 0:
            slab = lat_lp[idxs[li]:idxs[li + 1], :].astype(bf16)
            cfg["lat_idx"] = len(inputs)
            inputs.append(slab)
            in_specs.append(_stream_spec(lat_n))

        # feature weight, resident in VMEM
        w_feat = w[:, :cin_feat]
        if cin_feat == 1:
            cfg["feat_mode"] = "bcast"          # (Cout, 1) f32 outer product
        elif cout == 1:
            cfg["feat_mode"] = "reduce"         # store transposed (Cin, 1) f32
            w_feat = w_feat.T
        else:
            cfg["feat_mode"] = "dot"            # bf16 MXU matmul
            w_feat = w_feat.astype(bf16)
        cfg["w_feat"] = len(inputs)
        inputs.append(w_feat)
        in_specs.append(_resident_spec(tuple(w_feat.shape)))

        # latent weight, resident in VMEM
        if lat_n > 0:
            cfg["lat_dot"] = (lat_n >= 8) and (cout >= 8)
            w_lat = w[:, cin_feat:]
            if cfg["lat_dot"]:
                w_lat = w_lat.astype(bf16)
            cfg["w_lat"] = len(inputs)
            inputs.append(w_lat)
            in_specs.append(_resident_spec(tuple(w_lat.shape)))

        # bias, resident, f32
        cfg["bias"] = len(inputs)
        inputs.append(b.reshape(cout, 1))
        in_specs.append(_resident_spec((cout, 1)))

        plan.append(cfg)

    kernel = _build_kernel(plan, num_layers, alpha)

    out_lp = pl.pallas_call(
        kernel,
        out_shape=jax.ShapeDtypeStruct((1, p_pad), phases.dtype),
        grid_spec=pltpu.PrefetchScalarGridSpec(
            num_scalar_prefetch=0,
            grid=grid,
            in_specs=in_specs,
            out_specs=pl.BlockSpec((1, tile), lambda i: (0, i)),
        ),
        compiler_params=pltpu.CompilerParams(
            # pixel axis is purely data-parallel -> shards across TCs on v7x
            dimension_semantics=("parallel",),
            # explicit, small VMEM budget: safe on v5e/v6e (128 MiB) and v7x (64 MiB)
            vmem_limit_bytes=32 * 1024 * 1024,
        ),
    )(*inputs)

    return out_lp[:, :p_total].reshape(n, 1, hh, ww)


def latent_coded_mlp_reference(phases, latent_codes, weights, biases,
                               num_latent_codes, alpha=0.2):
    """Pure-JAX f32 reference matching the PyTorch forward."""
    num_layers = len(weights)
    if latent_codes is None:
        num_latent_codes = [0] * num_layers
    idxs = [sum(num_latent_codes[:y]) for y in range(num_layers + 1)]
    x = phases
    for i in range(num_layers):
        if latent_codes is not None and num_latent_codes[i] > 0:
            x = jnp.concatenate(
                [x, latent_codes[:, idxs[i]:idxs[i + 1], :, :]], axis=1)
        w, b = weights[i], biases[i]
        x = jnp.einsum("oc,nchw->nohw", w, x,
                       precision=jax.lax.Precision.HIGHEST)
        x = x + b[None, :, None, None]
        if i < num_layers - 1:
            x = jnp.where(x > 0, x, alpha * x)
    return phases - x


if __name__ == "__main__":
    key = jax.random.PRNGKey(0)

    num_layers = 5
    num_features = 32
    num_latent_codes = [2, 2, 2, 1, 1]          # L = 8 total latent channels
    l_total = sum(num_latent_codes)
    batch, height, width = 2, 16, 16

    feat_in = [num_features] * num_layers
    feat_in[0] = 1                               # [1, 32, 32, 32, 32]
    feat_out = feat_in[1:] + [1]                 # [32, 32, 32, 32, 1]

    keys = jax.random.split(key, 2 * num_layers + 2)
    weights, biases = [], []
    for i in range(num_layers):
        cin = feat_in[i] + num_latent_codes[i]
        cout = feat_out[i]
        weights.append(0.05 * jax.random.normal(keys[2 * i], (cout, cin), jnp.float32))
        biases.append(0.05 * jax.random.normal(keys[2 * i + 1], (cout,), jnp.float32))

    phases = jax.random.normal(keys[-2], (batch, 1, height, width), jnp.float32)
    latent_codes = jax.random.normal(
        keys[-1], (batch, l_total, height, width), jnp.float32)

    out = latent_coded_mlp_forward(phases, latent_codes, weights, biases,
                                   num_latent_codes)
    out = jax.block_until_ready(out)

    ref = jax.block_until_ready(
        latent_coded_mlp_reference(phases, latent_codes, weights, biases,
                                   num_latent_codes))

    assert out.shape == phases.shape, (out.shape, phases.shape)
    max_err = float(jnp.max(jnp.abs(out - ref)))
    assert max_err < 2e-2, f"mismatch vs reference, max abs err = {max_err}"
    print("KERNEL_OK")
</pallas_src>

<mosaic_0001>
module attributes {stable_mosaic.version = 11 : i64} {
  func.func @kernel(%arg0: i32, %arg1: memref<1x512xf32, #tpu.memory_space<vmem>>, %arg2: memref<2x512xbf16, #tpu.memory_space<vmem>>, %arg3: memref<32x1xf32, #tpu.memory_space<vmem>>, %arg4: memref<32x2xf32, #tpu.memory_space<vmem>>, %arg5: memref<32x1xf32, #tpu.memory_space<vmem>>, %arg6: memref<2x512xbf16, #tpu.memory_space<vmem>>, %arg7: memref<32x32xbf16, #tpu.memory_space<vmem>>, %arg8: memref<32x2xf32, #tpu.memory_space<vmem>>, %arg9: memref<32x1xf32, #tpu.memory_space<vmem>>, %arg10: memref<2x512xbf16, #tpu.memory_space<vmem>>, %arg11: memref<32x32xbf16, #tpu.memory_space<vmem>>, %arg12: memref<32x2xf32, #tpu.memory_space<vmem>>, %arg13: memref<32x1xf32, #tpu.memory_space<vmem>>, %arg14: memref<1x512xbf16, #tpu.memory_space<vmem>>, %arg15: memref<32x32xbf16, #tpu.memory_space<vmem>>, %arg16: memref<32x1xf32, #tpu.memory_space<vmem>>, %arg17: memref<32x1xf32, #tpu.memory_space<vmem>>, %arg18: memref<1x512xbf16, #tpu.memory_space<vmem>>, %arg19: memref<32x1xf32, #tpu.memory_space<vmem>>, %arg20: memref<1x1xf32, #tpu.memory_space<vmem>>, %arg21: memref<1x1xf32, #tpu.memory_space<vmem>>, %arg22: memref<1x512xf32, #tpu.memory_space<vmem>>) attributes {dimension_semantics = [#tpu.dimension_semantics<parallel>], iteration_bounds = array<i64: 1>, scalar_prefetch = 0 : i64, scratch_operands = 0 : i64, tpu.core_type = #tpu.core_type<tc>, window_params = [{transform_indices = @transform_0, window_bounds = array<i64: 1, 512>}, {transform_indices = @transform_1, window_bounds = array<i64: 2, 512>}, {pipeline_mode = #tpu.pipeline_mode<synchronous>, transform_indices = @transform_2, window_bounds = array<i64: 32, 1>}, {pipeline_mode = #tpu.pipeline_mode<synchronous>, transform_indices = @transform_3, window_bounds = array<i64: 32, 2>}, {pipeline_mode = #tpu.pipeline_mode<synchronous>, transform_indices = @transform_4, window_bounds = array<i64: 32, 1>}, {transform_indices = @transform_5, window_bounds = array<i64: 2, 512>}, {pipeline_mode = #tpu.pipeline_mode<synchronous>, transform_indices = @transform_6, window_bounds = array<i64: 32, 32>}, {pipeline_mode = #tpu.pipeline_mode<synchronous>, transform_indices = @transform_7, window_bounds = array<i64: 32, 2>}, {pipeline_mode = #tpu.pipeline_mode<synchronous>, transform_indices = @transform_8, window_bounds = array<i64: 32, 1>}, {transform_indices = @transform_9, window_bounds = array<i64: 2, 512>}, {pipeline_mode = #tpu.pipeline_mode<synchronous>, transform_indices = @transform_10, window_bounds = array<i64: 32, 32>}, {pipeline_mode = #tpu.pipeline_mode<synchronous>, transform_indices = @transform_11, window_bounds = array<i64: 32, 2>}, {pipeline_mode = #tpu.pipeline_mode<synchronous>, transform_indices = @transform_12, window_bounds = array<i64: 32, 1>}, {transform_indices = @transform_13, window_bounds = array<i64: 1, 512>}, {pipeline_mode = #tpu.pipeline_mode<synchronous>, transform_indices = @transform_14, window_bounds = array<i64: 32, 32>}, {pipeline_mode = #tpu.pipeline_mode<synchronous>, transform_indices = @transform_15, window_bounds = array<i64: 32, 1>}, {pipeline_mode = #tpu.pipeline_mode<synchronous>, transform_indices = @transform_16, window_bounds = array<i64: 32, 1>}, {transform_indices = @transform_17, window_bounds = array<i64: 1, 512>}, {pipeline_mode = #tpu.pipeline_mode<synchronous>, transform_indices = @transform_18, window_bounds = array<i64: 32, 1>}, {pipeline_mode = #tpu.pipeline_mode<synchronous>, transform_indices = @transform_19, window_bounds = array<i64: 1, 1>}, {pipeline_mode = #tpu.pipeline_mode<synchronous>, transform_indices = @transform_20, window_bounds = array<i64: 1, 1>}, {transform_indices = @transform_21, window_bounds = array<i64: 1, 512>}]} {
    %c0 = arith.constant 0 : index
    %c0_0 = arith.constant 0 : index
    %0 = vector.load %arg1[%c0, %c0_0] : memref<1x512xf32, #tpu.memory_space<vmem>>, vector<1x512xf32>
    %c0_1 = arith.constant 0 : index
    %c0_2 = arith.constant 0 : index
    %1 = vector.load %arg3[%c0_1, %c0_2] : memref<32x1xf32, #tpu.memory_space<vmem>>, vector<32x1xf32>
    %c0_3 = arith.constant 0 : index
    %c0_4 = arith.constant 0 : index
    %2 = vector.load %arg5[%c0_3, %c0_4] : memref<32x1xf32, #tpu.memory_space<vmem>>, vector<32x1xf32>
    %3 = vector.broadcast %1 : vector<32x1xf32> to vector<32x512xf32>
    %4 = vector.broadcast %0 : vector<1x512xf32> to vector<32x512xf32>
    %5 = arith.mulf %3, %4 : vector<32x512xf32>
    %c0_5 = arith.constant 0 : index
    %c0_6 = arith.constant 0 : index
    %6 = vector.load %arg2[%c0_5, %c0_6] : memref<2x512xbf16, #tpu.memory_space<vmem>>, vector<2x512xbf16>
    %c0_7 = arith.constant 0 : index
    %c0_8 = arith.constant 0 : index
    %7 = vector.load %arg4[%c0_7, %c0_8] : memref<32x2xf32, #tpu.memory_space<vmem>>, vector<32x2xf32>
    %8 = arith.extf %6 : vector<2x512xbf16> to vector<2x512xf32>
    %9 = vector.extract_strided_slice %7 {offsets = [0, 0], sizes = [32, 1], strides = [1, 1]} : vector<32x2xf32> to vector<32x1xf32>
    %10 = vector.extract_strided_slice %8 {offsets = [0, 0], sizes = [1, 512], strides = [1, 1]} : vector<2x512xf32> to vector<1x512xf32>
    %11 = vector.broadcast %9 : vector<32x1xf32> to vector<32x512xf32>
    %12 = vector.broadcast %10 : vector<1x512xf32> to vector<32x512xf32>
    %13 = arith.mulf %11, %12 : vector<32x512xf32>
    %14 = arith.addf %5, %13 : vector<32x512xf32>
    %15 = vector.extract_strided_slice %7 {offsets = [0, 1], sizes = [32, 1], strides = [1, 1]} : vector<32x2xf32> to vector<32x1xf32>
    %16 = vector.extract_strided_slice %8 {offsets = [1, 0], sizes = [1, 512], strides = [1, 1]} : vector<2x512xf32> to vector<1x512xf32>
    %17 = vector.broadcast %15 : vector<32x1xf32> to vector<32x512xf32>
    %18 = vector.broadcast %16 : vector<1x512xf32> to vector<32x512xf32>
    %19 = arith.mulf %17, %18 : vector<32x512xf32>
    %20 = arith.addf %14, %19 : vector<32x512xf32>
    %21 = vector.broadcast %2 : vector<32x1xf32> to vector<32x512xf32>
    %22 = arith.addf %20, %21 : vector<32x512xf32>
    %cst = arith.constant 2.000000e-01 : f32
    %23 = vector.broadcast %cst : f32 to vector<32x512xf32>
    %24 = arith.mulf %23, %22 : vector<32x512xf32>
    %25 = arith.maximumf %22, %24 : vector<32x512xf32>
    %c0_9 = arith.constant 0 : index
    %c0_10 = arith.constant 0 : index
    %26 = vector.load %arg7[%c0_9, %c0_10] : memref<32x32xbf16, #tpu.memory_space<vmem>>, vector<32x32xbf16>
    %c0_11 = arith.constant 0 : index
    %c0_12 = arith.constant 0 : index
    %27 = vector.load %arg9[%c0_11, %c0_12] : memref<32x1xf32, #tpu.memory_space<vmem>>, vector<32x1xf32>
    %28 = arith.truncf %25 : vector<32x512xf32> to vector<32x512xbf16>
    %cst_13 = arith.constant dense<0.000000e+00> : vector<32x512xf32>
    %29 = tpu.matmul %26, %28, %cst_13 {dimension_numbers = #tpu.dot_dimension_numbers<[1], [0], [0], [1], [0, 0, 1, 1], [], []>} : vector<32x32xbf16>, vector<32x512xbf16>, vector<32x512xf32> -> vector<32x512xf32>
    %c0_14 = arith.constant 0 : index
    %c0_15 = arith.constant 0 : index
    %30 = vector.load %arg6[%c0_14, %c0_15] : memref<2x512xbf16, #tpu.memory_space<vmem>>, vector<2x512xbf16>
    %c0_16 = arith.constant 0 : index
    %c0_17 = arith.constant 0 : index
    %31 = vector.load %arg8[%c0_16, %c0_17] : memref<32x2xf32, #tpu.memory_space<vmem>>, vector<32x2xf32>
    %32 = arith.extf %30 : vector<2x512xbf16> to vector<2x512xf32>
    %33 = vector.extract_strided_slice %31 {offsets = [0, 0], sizes = [32, 1], strides = [1, 1]} : vector<32x2xf32> to vector<32x1xf32>
    %34 = vector.extract_strided_slice %32 {offsets = [0, 0], sizes = [1, 512], strides = [1, 1]} : vector<2x512xf32> to vector<1x512xf32>
    %35 = vector.broadcast %33 : vector<32x1xf32> to vector<32x512xf32>
    %36 = vector.broadcast %34 : vector<1x512xf32> to vector<32x512xf32>
    %37 = arith.mulf %35, %36 : vector<32x512xf32>
    %38 = arith.addf %29, %37 : vector<32x512xf32>
    %39 = vector.extract_strided_slice %31 {offsets = [0, 1], sizes = [32, 1], strides = [1, 1]} : vector<32x2xf32> to vector<32x1xf32>
    %40 = vector.extract_strided_slice %32 {offsets = [1, 0], sizes = [1, 512], strides = [1, 1]} : vector<2x512xf32> to vector<1x512xf32>
    %41 = vector.broadcast %39 : vector<32x1xf32> to vector<32x512xf32>
    %42 = vector.broadcast %40 : vector<1x512xf32> to vector<32x512xf32>
    %43 = arith.mulf %41, %42 : vector<32x512xf32>
    %44 = arith.addf %38, %43 : vector<32x512xf32>
    %45 = vector.broadcast %27 : vector<32x1xf32> to vector<32x512xf32>
    %46 = arith.addf %44, %45 : vector<32x512xf32>
    %cst_18 = arith.constant 2.000000e-01 : f32
    %47 = vector.broadcast %cst_18 : f32 to vector<32x512xf32>
    %48 = arith.mulf %47, %46 : vector<32x512xf32>
    %49 = arith.maximumf %46, %48 : vector<32x512xf32>
    %c0_19 = arith.constant 0 : index
    %c0_20 = arith.constant 0 : index
    %50 = vector.load %arg11[%c0_19, %c0_20] : memref<32x32xbf16, #tpu.memory_space<vmem>>, vector<32x32xbf16>
    %c0_21 = arith.constant 0 : index
    %c0_22 = arith.constant 0 : index
    %51 = vector.load %arg13[%c0_21, %c0_22] : memref<32x1xf32, #tpu.memory_space<vmem>>, vector<32x1xf32>
    %52 = arith.truncf %49 : vector<32x512xf32> to vector<32x512xbf16>
    %cst_23 = arith.constant dense<0.000000e+00> : vector<32x512xf32>
    %53 = tpu.matmul %50, %52, %cst_23 {dimension_numbers = #tpu.dot_dimension_numbers<[1], [0], [0], [1], [0, 0, 1, 1], [], []>} : vector<32x32xbf16>, vector<32x512xbf16>, vector<32x512xf32> -> vector<32x512xf32>
    %c0_24 = arith.constant 0 : index
    %c0_25 = arith.constant 0 : index
    %54 = vector.load %arg10[%c0_24, %c0_25] : memref<2x512xbf16, #tpu.memory_space<vmem>>, vector<2x512xbf16>
    %c0_26 = arith.constant 0 : index
    %c0_27 = arith.constant 0 : index
    %55 = vector.load %arg12[%c0_26, %c0_27] : memref<32x2xf32, #tpu.memory_space<vmem>>, vector<32x2xf32>
    %56 = arith.extf %54 : vector<2x512xbf16> to vector<2x512xf32>
    %57 = vector.extract_strided_slice %55 {offsets = [0, 0], sizes = [32, 1], strides = [1, 1]} : vector<32x2xf32> to vector<32x1xf32>
    %58 = vector.extract_strided_slice %56 {offsets = [0, 0], sizes = [1, 512], strides = [1, 1]} : vector<2x512xf32> to vector<1x512xf32>
    %59 = vector.broadcast %57 : vector<32x1xf32> to vector<32x512xf32>
    %60 = vector.broadcast %58 : vector<1x512xf32> to vector<32x512xf32>
    %61 = arith.mulf %59, %60 : vector<32x512xf32>
    %62 = arith.addf %53, %61 : vector<32x512xf32>
    %63 = vector.extract_strided_slice %55 {offsets = [0, 1], sizes = [32, 1], strides = [1, 1]} : vector<32x2xf32> to vector<32x1xf32>
    %64 = vector.extract_strided_slice %56 {offsets = [1, 0], sizes = [1, 512], strides = [1, 1]} : vector<2x512xf32> to vector<1x512xf32>
    %65 = vector.broadcast %63 : vector<32x1xf32> to vector<32x512xf32>
    %66 = vector.broadcast %64 : vector<1x512xf32> to vector<32x512xf32>
    %67 = arith.mulf %65, %66 : vector<32x512xf32>
    %68 = arith.addf %62, %67 : vector<32x512xf32>
    %69 = vector.broadcast %51 : vector<32x1xf32> to vector<32x512xf32>
    %70 = arith.addf %68, %69 : vector<32x512xf32>
    %cst_28 = arith.constant 2.000000e-01 : f32
    %71 = vector.broadcast %cst_28 : f32 to vector<32x512xf32>
    %72 = arith.mulf %71, %70 : vector<32x512xf32>
    %73 = arith.maximumf %70, %72 : vector<32x512xf32>
    %c0_29 = arith.constant 0 : index
    %c0_30 = arith.constant 0 : index
    %74 = vector.load %arg15[%c0_29, %c0_30] : memref<32x32xbf16, #tpu.memory_space<vmem>>, vector<32x32xbf16>
    %c0_31 = arith.constant 0 : index
    %c0_32 = arith.constant 0 : index
    %75 = vector.load %arg17[%c0_31, %c0_32] : memref<32x1xf32, #tpu.memory_space<vmem>>, vector<32x1xf32>
    %76 = arith.truncf %73 : vector<32x512xf32> to vector<32x512xbf16>
    %cst_33 = arith.constant dense<0.000000e+00> : vector<32x512xf32>
    %77 = tpu.matmul %74, %76, %cst_33 {dimension_numbers = #tpu.dot_dimension_numbers<[1], [0], [0], [1], [0, 0, 1, 1], [], []>} : vector<32x32xbf16>, vector<32x512xbf16>, vector<32x512xf32> -> vector<32x512xf32>
    %c0_34 = arith.constant 0 : index
    %c0_35 = arith.constant 0 : index
    %78 = vector.load %arg14[%c0_34, %c0_35] : memref<1x512xbf16, #tpu.memory_space<vmem>>, vector<1x512xbf16>
    %c0_36 = arith.constant 0 : index
    %c0_37 = arith.constant 0 : index
    %79 = vector.load %arg16[%c0_36, %c0_37] : memref<32x1xf32, #tpu.memory_space<vmem>>, vector<32x1xf32>
    %80 = arith.extf %78 : vector<1x512xbf16> to vector<1x512xf32>
    %81 = vector.broadcast %79 : vector<32x1xf32> to vector<32x512xf32>
    %82 = vector.broadcast %80 : vector<1x512xf32> to vector<32x512xf32>
    %83 = arith.mulf %81, %82 : vector<32x512xf32>
    %84 = arith.addf %77, %83 : vector<32x512xf32>
    %85 = vector.broadcast %75 : vector<32x1xf32> to vector<32x512xf32>
    %86 = arith.addf %84, %85 : vector<32x512xf32>
    %cst_38 = arith.constant 2.000000e-01 : f32
    %87 = vector.broadcast %cst_38 : f32 to vector<32x512xf32>
    %88 = arith.mulf %87, %86 : vector<32x512xf32>
    %89 = arith.maximumf %86, %88 : vector<32x512xf32>
    %c0_39 = arith.constant 0 : index
    %c0_40 = arith.constant 0 : index
    %90 = vector.load %arg19[%c0_39, %c0_40] : memref<32x1xf32, #tpu.memory_space<vmem>>, vector<32x1xf32>
    %c0_41 = arith.constant 0 : index
    %c0_42 = arith.constant 0 : index
    %91 = vector.load %arg21[%c0_41, %c0_42] : memref<1x1xf32, #tpu.memory_space<vmem>>, vector<1x1xf32>
    %92 = vector.broadcast %90 : vector<32x1xf32> to vector<32x512xf32>
    %93 = arith.mulf %92, %89 : vector<32x512xf32>
    %cst_43 = arith.constant dense<0.000000e+00> : vector<512xf32>
    %94 = vector.multi_reduction <add>, %93, %cst_43 [0] : vector<32x512xf32> to vector<512xf32>
    %95 = vector.shape_cast %94 : vector<512xf32> to vector<1x512xf32>
    %c0_44 = arith.constant 0 : index
    %c0_45 = arith.constant 0 : index
    %96 = vector.load %arg18[%c0_44, %c0_45] : memref<1x512xbf16, #tpu.memory_space<vmem>>, vector<1x512xbf16>
    %c0_46 = arith.constant 0 : index
    %c0_47 = arith.constant 0 : index
    %97 = vector.load %arg20[%c0_46, %c0_47] : memref<1x1xf32, #tpu.memory_space<vmem>>, vector<1x1xf32>
    %98 = arith.extf %96 : vector<1x512xbf16> to vector<1x512xf32>
    %99 = vector.broadcast %97 : vector<1x1xf32> to vector<1x512xf32>
    %100 = arith.mulf %99, %98 : vector<1x512xf32>
    %101 = arith.addf %95, %100 : vector<1x512xf32>
    %102 = vector.broadcast %91 : vector<1x1xf32> to vector<1x512xf32>
    %103 = arith.addf %101, %102 : vector<1x512xf32>
    %104 = arith.subf %0, %103 : vector<1x512xf32>
    %c0_48 = arith.constant 0 : index
    %c0_49 = arith.constant 0 : index
    %105 = vector.load %arg22[%c0_48, %c0_49] : memref<1x512xf32, #tpu.memory_space<vmem>>, vector<1x512xf32>
    tpu.vector_store %arg22[%c0_48, %c0_49], %104 {strides = array<i32>} : memref<1x512xf32, #tpu.memory_space<vmem>>, vector<1x512xf32>,
    return
  }
  func.func @transform_0(%arg0: i32) -> (i32, i32) {
    %c0_i32 = arith.constant 0 : i32
    %c0_i32_0 = arith.constant 0 : i32
    return %c0_i32, %arg0 : i32, i32
  }
  func.func @transform_1(%arg0: i32) -> (i32, i32) {
    %c0_i32 = arith.constant 0 : i32
    %c0_i32_0 = arith.constant 0 : i32
    return %c0_i32, %arg0 : i32, i32
  }
  func.func @transform_2(%arg0: i32) -> (i32, i32) {
    %c0_i32 = arith.constant 0 : i32
    %c0_i32_0 = arith.constant 0 : i32
    %c0_i32_1 = arith.constant 0 : i32
    return %c0_i32, %c0_i32_0 : i32, i32
  }
  func.func @transform_3(%arg0: i32) -> (i32, i32) {
    %c0_i32 = arith.constant 0 : i32
    %c0_i32_0 = arith.constant 0 : i32
    %c0_i32_1 = arith.constant 0 : i32
    return %c0_i32, %c0_i32_0 : i32, i32
  }
  func.func @transform_4(%arg0: i32) -> (i32, i32) {
    %c0_i32 = arith.constant 0 : i32
    %c0_i32_0 = arith.constant 0 : i32
    %c0_i32_1 = arith.constant 0 : i32
    return %c0_i32, %c0_i32_0 : i32, i32
  }
  func.func @transform_5(%arg0: i32) -> (i32, i32) {
    %c0_i32 = arith.constant 0 : i32
    %c0_i32_0 = arith.constant 0 : i32
    return %c0_i32, %arg0 : i32, i32
  }
  func.func @transform_6(%arg0: i32) -> (i32, i32) {
    %c0_i32 = arith.constant 0 : i32
    %c0_i32_0 = arith.constant 0 : i32
    %c0_i32_1 = arith.constant 0 : i32
    return %c0_i32, %c0_i32_0 : i32, i32
  }
  func.func @transform_7(%arg0: i32) -> (i32, i32) {
    %c0_i32 = arith.constant 0 : i32
    %c0_i32_0 = arith.constant 0 : i32
    %c0_i32_1 = arith.constant 0 : i32
    return %c0_i32, %c0_i32_0 : i32, i32
  }
  func.func @transform_8(%arg0: i32) -> (i32, i32) {
    %c0_i32 = arith.constant 0 : i32
    %c0_i32_0 = arith.constant 0 : i32
    %c0_i32_1 = arith.constant 0 : i32
    return %c0_i32, %c0_i32_0 : i32, i32
  }
  func.func @transform_9(%arg0: i32) -> (i32, i32) {
    %c0_i32 = arith.constant 0 : i32
    %c0_i32_0 = arith.constant 0 : i32
    return %c0_i32, %arg0 : i32, i32
  }
  func.func @transform_10(%arg0: i32) -> (i32, i32) {
    %c0_i32 = arith.constant 0 : i32
    %c0_i32_0 = arith.constant 0 : i32
    %c0_i32_1 = arith.constant 0 : i32
    return %c0_i32, %c0_i32_0 : i32, i32
  }
  func.func @transform_11(%arg0: i32) -> (i32, i32) {
    %c0_i32 = arith.constant 0 : i32
    %c0_i32_0 = arith.constant 0 : i32
    %c0_i32_1 = arith.constant 0 : i32
    return %c0_i32, %c0_i32_0 : i32, i32
  }
  func.func @transform_12(%arg0: i32) -> (i32, i32) {
    %c0_i32 = arith.constant 0 : i32
    %c0_i32_0 = arith.constant 0 : i32
    %c0_i32_1 = arith.constant 0 : i32
    return %c0_i32, %c0_i32_0 : i32, i32
  }
  func.func @transform_13(%arg0: i32) -> (i32, i32) {
    %c0_i32 = arith.constant 0 : i32
    %c0_i32_0 = arith.constant 0 : i32
    return %c0_i32, %arg0 : i32, i32
  }
  func.func @transform_14(%arg0: i32) -> (i32, i32) {
    %c0_i32 = arith.constant 0 : i32
    %c0_i32_0 = arith.constant 0 : i32
    %c0_i32_1 = arith.constant 0 : i32
    return %c0_i32, %c0_i32_0 : i32, i32
  }
  func.func @transform_15(%arg0: i32) -> (i32, i32) {
    %c0_i32 = arith.constant 0 : i32
    %c0_i32_0 = arith.constant 0 : i32
    %c0_i32_1 = arith.constant 0 : i32
    return %c0_i32, %c0_i32_0 : i32, i32
  }
  func.func @transform_16(%arg0: i32) -> (i32, i32) {
    %c0_i32 = arith.constant 0 : i32
    %c0_i32_0 = arith.constant 0 : i32
    %c0_i32_1 = arith.constant 0 : i32
    return %c0_i32, %c0_i32_0 : i32, i32
  }
  func.func @transform_17(%arg0: i32) -> (i32, i32) {
    %c0_i32 = arith.constant 0 : i32
    %c0_i32_0 = arith.constant 0 : i32
    return %c0_i32, %arg0 : i32, i32
  }
  func.func @transform_18(%arg0: i32) -> (i32, i32) {
    %c0_i32 = arith.constant 0 : i32
    %c0_i32_0 = arith.constant 0 : i32
    %c0_i32_1 = arith.constant 0 : i32
    return %c0_i32, %c0_i32_0 : i32, i32
  }
  func.func @transform_19(%arg0: i32) -> (i32, i32) {
    %c0_i32 = arith.constant 0 : i32
    %c0_i32_0 = arith.constant 0 : i32
    %c0_i32_1 = arith.constant 0 : i32
    return %c0_i32, %c0_i32_0 : i32, i32
  }
  func.func @transform_20(%arg0: i32) -> (i32, i32) {
    %c0_i32 = arith.constant 0 : i32
    %c0_i32_0 = arith.constant 0 : i32
    %c0_i32_1 = arith.constant 0 : i32
    return %c0_i32, %c0_i32_0 : i32, i32
  }
  func.func @transform_21(%arg0: i32) -> (i32, i32) {
    %c0_i32 = arith.constant 0 : i32
    %c0_i32_0 = arith.constant 0 : i32
    return %c0_i32, %arg0 : i32, i32
  }
}

</mosaic_0001>

<llo_original>
// kernel: tpu_custom_call.1
$region0: #{tpu_custom_call.1}
  #allocation0 [shape = 'u32[]', space=smem, size = 0x4, offset = 0x4, fixed_abs, tag = 'smem constant byte address 0x4 - core index']
  #allocation1 [shape = 'u32[72,128]{1,0:T(1,128)}', space=vmem, size = 0x9000, scoped, tag = 'internal scratch']
  #allocation2 [shape = 'f32[1,1]{1,0:T(1,128)S(1)}', space=vmem, size = 0x200, scoped, tag = 'scoped memory for tpu_custom_call.1']
  #allocation3 [shape = 'f32[1,1]{1,0:T(1,128)S(1)}', space=vmem, size = 0x200, scoped, tag = 'scoped memory for tpu_custom_call.1']
  %s0 = inlined_call_operand.vmem [shape: f32[1,512], index: 0, kind: input, shape index: {}]
  %s1 = inlined_call_operand.vmem [shape: bf16[2,512], index: 1, kind: input, shape index: {}]
  %s2 = inlined_call_operand.vmem [shape: f32[32,1], index: 2, kind: input, shape index: {}]
  %s3 = inlined_call_operand.vmem [shape: f32[32,2], index: 3, kind: input, shape index: {}]
  %s4 = inlined_call_operand.vmem [shape: f32[32,1], index: 4, kind: input, shape index: {}]
  %s5 = inlined_call_operand.vmem [shape: bf16[2,512], index: 5, kind: input, shape index: {}]
  %s6 = inlined_call_operand.vmem [shape: bf16[32,32], index: 6, kind: input, shape index: {}]
  %s7 = inlined_call_operand.vmem [shape: f32[32,2], index: 7, kind: input, shape index: {}]
  %s8 = inlined_call_operand.vmem [shape: f32[32,1], index: 8, kind: input, shape index: {}]
  %s9 = inlined_call_operand.vmem [shape: bf16[2,512], index: 9, kind: input, shape index: {}]
  %s10 = inlined_call_operand.vmem [shape: bf16[32,32], index: 10, kind: input, shape index: {}]
  %s11 = inlined_call_operand.vmem [shape: f32[32,2], index: 11, kind: input, shape index: {}]
  %s12 = inlined_call_operand.vmem [shape: f32[32,1], index: 12, kind: input, shape index: {}]
  %s13 = inlined_call_operand.vmem [shape: bf16[1,512], index: 13, kind: input, shape index: {}]
  %s14 = inlined_call_operand.vmem [shape: bf16[32,32], index: 14, kind: input, shape index: {}]
  %s15 = inlined_call_operand.vmem [shape: f32[32,1], index: 15, kind: input, shape index: {}]
  %s16 = inlined_call_operand.vmem [shape: f32[32,1], index: 16, kind: input, shape index: {}]
  %s17 = inlined_call_operand.vmem [shape: bf16[1,512], index: 17, kind: input, shape index: {}]
  %s18 = inlined_call_operand.vmem [shape: f32[32,1], index: 18, kind: input, shape index: {}]
  %s19 = inlined_call_operand.<no memory space> [shape: f32[1,1], index: 19, kind: input, shape index: {}]
  %s20 = inlined_call_operand.<no memory space> [shape: f32[1,1], index: 20, kind: input, shape index: {}]
  %s21 = inlined_call_operand.hbm [shape: f32[1,512], index: 21, kind: output, shape index: {}]
  %s22 = sld [smem:[#allocation0]]
  $region94: #{tpu_custom_call.1} parent=0
    _
  %s24 = ssub.s32 1, %s22
  %s25 = scalar_select 0, %s24, %s22
  %v26 = vstv %s19
  %27 = vst [vmem:[#allocation2] sm:$0x1] %v26
  %v28 = vstv %s20
  %29 = vst [vmem:[#allocation3] sm:$0x1] %v28
  $region1: #{tpu_custom_call.1} parent=0
    #allocation4 [shape = 'u8[2048]{0}', space=vmem, size = 0x800, scoped, tag = 'output window, operand 0, single buffered']
    #allocation5 [shape = 's32[1]{0}', space=sflag, size = 0x4, scoped, tag = 'scoped memory for tpu_custom_call.1']
    %30 = vsyncpa [#allocation5], 0
    // Predicated region
    $region2: #{tpu_custom_call.1} parent=1 // pred_check
      _
    $region3: #{tpu_custom_call.1} parent=1 // pred_check_branch
      %32 = sbr.rel (0) target = $region5
    $region4: #{tpu_custom_call.1} parent=1 // pred_region
      _
    $region5: #{tpu_custom_call.1} parent=1 // pred_fallthru
      _
    // Predicated region
    $region6: #{tpu_custom_call.1} parent=1 // pred_check
      _
    $region7: #{tpu_custom_call.1} parent=1 // pred_check_branch
      %34 = sbr.rel (0) target = $region9
    $region8: #{tpu_custom_call.1} parent=1 // pred_region
      _
    $region9: #{tpu_custom_call.1} parent=1 // pred_fallthru
      _
    // Predicated region
    $region10: #{tpu_custom_call.1} parent=1 // pred_check
      _
    $region11: #{tpu_custom_call.1} parent=1 // pred_check_branch
      %36 = sbr.rel (0) target = $region13
    $region12: #{tpu_custom_call.1} parent=1 // pred_region
      _
    $region13: #{tpu_custom_call.1} parent=1 // pred_fallthru
      _
    // Predicated region
    $region14: #{tpu_custom_call.1} parent=1 // pred_check
      _
    $region15: #{tpu_custom_call.1} parent=1 // pred_check_branch
      %38 = sbr.rel (0) target = $region17
    $region16: #{tpu_custom_call.1} parent=1 // pred_region
      _
    $region17: #{tpu_custom_call.1} parent=1 // pred_fallthru
      _
    // Predicated region
    $region18: #{tpu_custom_call.1} parent=1 // pred_check
      _
    $region19: #{tpu_custom_call.1} parent=1 // pred_check_branch
      %40 = sbr.rel (0) target = $region21
    $region20: #{tpu_custom_call.1} parent=1 // pred_region
      _
    $region21: #{tpu_custom_call.1} parent=1 // pred_fallthru
      _
    // Predicated region
    $region22: #{tpu_custom_call.1} parent=1 // pred_check
      _
    $region23: #{tpu_custom_call.1} parent=1 // pred_check_branch
      %42 = sbr.rel (0) target = $region25
    $region24: #{tpu_custom_call.1} parent=1 // pred_region
      _
    $region25: #{tpu_custom_call.1} parent=1 // pred_fallthru
      _
    // Predicated region
    $region26: #{tpu_custom_call.1} parent=1 // pred_check
      _
    $region27: #{tpu_custom_call.1} parent=1 // pred_check_branch
      %44 = sbr.rel (0) target = $region29
    $region28: #{tpu_custom_call.1} parent=1 // pred_region
      _
    $region29: #{tpu_custom_call.1} parent=1 // pred_fallthru
      _
    // Predicated region
    $region30: #{tpu_custom_call.1} parent=1 // pred_check
      _
    $region31: #{tpu_custom_call.1} parent=1 // pred_check_branch
      %46 = sbr.rel (0) target = $region33
    $region32: #{tpu_custom_call.1} parent=1 // pred_region
      _
    $region33: #{tpu_custom_call.1} parent=1 // pred_fallthru
      _
    // Predicated region
    $region34: #{tpu_custom_call.1} parent=1 // pred_check
      _
    $region35: #{tpu_custom_call.1} parent=1 // pred_check_branch
      %48 = sbr.rel (0) target = $region37
    $region36: #{tpu_custom_call.1} parent=1 // pred_region
      _
    $region37: #{tpu_custom_call.1} parent=1 // pred_fallthru
      _
    // Predicated region
    $region38: #{tpu_custom_call.1} parent=1 // pred_check
      _
    $region39: #{tpu_custom_call.1} parent=1 // pred_check_branch
      %50 = sbr.rel (0) target = $region41
    $region40: #{tpu_custom_call.1} parent=1 // pred_region
      _
    $region41: #{tpu_custom_call.1} parent=1 // pred_fallthru
      _
    // Predicated region
    $region42: #{tpu_custom_call.1} parent=1 // pred_check
      _
    $region43: #{tpu_custom_call.1} parent=1 // pred_check_branch
      %52 = sbr.rel (0) target = $region45
    $region44: #{tpu_custom_call.1} parent=1 // pred_region
      _
    $region45: #{tpu_custom_call.1} parent=1 // pred_fallthru
      _
    // Predicated region
    $region46: #{tpu_custom_call.1} parent=1 // pred_check
      _
    $region47: #{tpu_custom_call.1} parent=1 // pred_check_branch
      %54 = sbr.rel (0) target = $region49
    $region48: #{tpu_custom_call.1} parent=1 // pred_region
      _
    $region49: #{tpu_custom_call.1} parent=1 // pred_fallthru
      _
    // Predicated region
    $region50: #{tpu_custom_call.1} parent=1 // pred_check
      _
    $region51: #{tpu_custom_call.1} parent=1 // pred_check_branch
      %56 = sbr.rel (0) target = $region53
    $region52: #{tpu_custom_call.1} parent=1 // pred_region
      _
    $region53: #{tpu_custom_call.1} parent=1 // pred_fallthru
      _
    // Predicated region
    $region54: #{tpu_custom_call.1} parent=1 // pred_check
      _
    $region55: #{tpu_custom_call.1} parent=1 // pred_check_branch
      %58 = sbr.rel (0) target = $region57
    $region56: #{tpu_custom_call.1} parent=1 // pred_region
      _
    $region57: #{tpu_custom_call.1} parent=1 // pred_fallthru
      _
    // Predicated region
    $region58: #{tpu_custom_call.1} parent=1 // pred_check
      _
    $region59: #{tpu_custom_call.1} parent=1 // pred_check_branch
      %60 = sbr.rel (0) target = $region61
    $region60: #{tpu_custom_call.1} parent=1 // pred_region
      _
    $region61: #{tpu_custom_call.1} parent=1 // pred_fallthru
      _
    // Predicated region
    $region62: #{tpu_custom_call.1} parent=1 // pred_check
      _
    $region63: #{tpu_custom_call.1} parent=1 // pred_check_branch
      %62 = sbr.rel (0) target = $region65
    $region64: #{tpu_custom_call.1} parent=1 // pred_region
      _
    $region65: #{tpu_custom_call.1} parent=1 // pred_fallthru
      _
    // Predicated region
    $region66: #{tpu_custom_call.1} parent=1 // pred_check
      _
    $region67: #{tpu_custom_call.1} parent=1 // pred_check_branch
      %64 = sbr.rel (0) target = $region69
    $region68: #{tpu_custom_call.1} parent=1 // pred_region
      _
    $region69: #{tpu_custom_call.1} parent=1 // pred_fallthru
      _
    // Predicated region
    $region70: #{tpu_custom_call.1} parent=1 // pred_check
      _
    $region71: #{tpu_custom_call.1} parent=1 // pred_check_branch
      %66 = sbr.rel (0) target = $region73
    $region72: #{tpu_custom_call.1} parent=1 // pred_region
      _
    $region73: #{tpu_custom_call.1} parent=1 // pred_fallthru
      _
    // Predicated region
    $region74: #{tpu_custom_call.1} parent=1 // pred_check
      _
    $region75: #{tpu_custom_call.1} parent=1 // pred_check_branch
      %68 = sbr.rel (0) target = $region77
    $region76: #{tpu_custom_call.1} parent=1 // pred_region
      _
    $region77: #{tpu_custom_call.1} parent=1 // pred_fallthru
      _
    // Predicated region
    $region78: #{tpu_custom_call.1} parent=1 // pred_check
      _
    $region79: #{tpu_custom_call.1} parent=1 // pred_check_branch
      %70 = sbr.rel (0) target = $region81
    $region80: #{tpu_custom_call.1} parent=1 // pred_region
      _
    $region81: #{tpu_custom_call.1} parent=1 // pred_fallthru
      _
    // Predicated region
    $region82: #{tpu_custom_call.1} parent=1 // pred_check
      _
    $region83: #{tpu_custom_call.1} parent=1 // pred_check_branch
      %72 = sbr.rel (0) target = $region85
    $region84: #{tpu_custom_call.1} parent=1 // pred_region
      _
    $region85: #{tpu_custom_call.1} parent=1 // pred_fallthru
      _
    %v74 = vld [vmem:[%s0] sm:$0xf]
    %v75 = vld [vmem:[%s2] sm:$0xff]
    %v76 = vld [vmem:[%s2 + $0x8] sm:$0xff]
    %v77 = vld [vmem:[%s2 + $0x10] sm:$0xff]
    %v78 = vld [vmem:[%s2 + $0x18] sm:$0xff]
    %v79 = vld [vmem:[%s4] sm:$0xff]
    %v80 = vld [vmem:[%s4 + $0x8] sm:$0xff]
    %v81 = vld [vmem:[%s4 + $0x10] sm:$0xff]
    %v82 = vld [vmem:[%s4 + $0x18] sm:$0xff]
    %84 = vset.pattern.permute.xlu0 0
    %85 = vperm.xlu0 %84, %v75
    %v86 = vpop.permute.xlu0 %85
    %89 = vset.pattern.permute.xlu0 0
    %90 = vperm.xlu0 %89, %v76
    %v91 = vpop.permute.xlu0 %90
    %94 = vset.pattern.permute.xlu0 0
    %95 = vperm.xlu0 %94, %v77
    %v96 = vpop.permute.xlu0 %95
    %99 = vset.pattern.permute.xlu0 0
    %100 = vperm.xlu0 %99, %v78
    %v101 = vpop.permute.xlu0 %100
    %v104 = vperm.slane %v74, 0
    %v105 = vperm.slane %v74, 1
    %v106 = vperm.slane %v74, 2
    %v107 = vperm.slane %v74, 3
    %v112 = vmul.f32 %v86, %v104
    %v113 = vmul.f32 %v86, %v105
    %v114 = vmul.f32 %v86, %v106
    %v115 = vmul.f32 %v86, %v107
    %v116 = vmul.f32 %v91, %v104
    %v117 = vmul.f32 %v91, %v105
    %v118 = vmul.f32 %v91, %v106
    %v119 = vmul.f32 %v91, %v107
    %v120 = vmul.f32 %v96, %v104
    %v121 = vmul.f32 %v96, %v105
    %v122 = vmul.f32 %v96, %v106
    %v123 = vmul.f32 %v96, %v107
    %v124 = vmul.f32 %v101, %v104
    %v125 = vmul.f32 %v101, %v105
    %v126 = vmul.f32 %v101, %v106
    %v127 = vmul.f32 %v101, %v107
    %v128 = vld [vmem:[%s1] sm:$0xf]
    %v129 = vld [vmem:[%s3] sm:$0xff]
    %v130 = vld [vmem:[%s3 + $0x8] sm:$0xff]
    %v131 = vld [vmem:[%s3 + $0x10] sm:$0xff]
    %v132 = vld [vmem:[%s3 + $0x18] sm:$0xff]
    %v133 = vunpack.c.l.bf16 %v128
    %135 = vset.pattern.permute.xlu0 0
    %136 = vperm.xlu0 %135, %v129
    %v137 = vpop.permute.xlu0 %136
    %140 = vset.pattern.permute.xlu0 0
    %141 = vperm.xlu0 %140, %v130
    %v142 = vpop.permute.xlu0 %141
    %145 = vset.pattern.permute.xlu0 0
    %146 = vperm.xlu0 %145, %v131
    %v147 = vpop.permute.xlu0 %146
    %150 = vset.pattern.permute.xlu0 0
    %151 = vperm.xlu0 %150, %v132
    %v152 = vpop.permute.xlu0 %151
    %v155 = vperm.slane %v133, 0
    %v156 = vperm.slane %v133, 2
    %v157 = vperm.slane %v133, 4
    %v158 = vperm.slane %v133, 6
    %v163 = vperm.slane %v155, 0
    %v164 = vperm.slane %v156, 0
    %v165 = vperm.slane %v157, 0
    %v166 = vperm.slane %v158, 0
    %v167 = vmul.f32 %v137, %v163
    %v168 = vmul.f32 %v137, %v164
    %v169 = vmul.f32 %v137, %v165
    %v170 = vmul.f32 %v137, %v166
    %v171 = vmul.f32 %v142, %v163
    %v172 = vmul.f32 %v142, %v164
    %v173 = vmul.f32 %v142, %v165
    %v174 = vmul.f32 %v142, %v166
    %v175 = vmul.f32 %v147, %v163
    %v176 = vmul.f32 %v147, %v164
    %v177 = vmul.f32 %v147, %v165
    %v178 = vmul.f32 %v147, %v166
    %v179 = vmul.f32 %v152, %v163
    %v180 = vmul.f32 %v152, %v164
    %v181 = vmul.f32 %v152, %v165
    %v182 = vmul.f32 %v152, %v166
    %v183 = vadd.f32 %v112, %v167
    %v184 = vadd.f32 %v113, %v168
    %v185 = vadd.f32 %v114, %v169
    %v186 = vadd.f32 %v115, %v170
    %v187 = vadd.f32 %v116, %v171
    %v188 = vadd.f32 %v117, %v172
    %v189 = vadd.f32 %v118, %v173
    %v190 = vadd.f32 %v119, %v174
    %v191 = vadd.f32 %v120, %v175
    %v192 = vadd.f32 %v121, %v176
    %v193 = vadd.f32 %v122, %v177
    %v194 = vadd.f32 %v123, %v178
    %v195 = vadd.f32 %v124, %v179
    %v196 = vadd.f32 %v125, %v180
    %v197 = vadd.f32 %v126, %v181
    %v198 = vadd.f32 %v127, %v182
    %199 = vset.pattern.permute.xlu0 1
    %200 = vperm.xlu0 %199, %v129
    %v201 = vpop.permute.xlu0 %200
    %203 = vset.pattern.permute.xlu0 1
    %204 = vperm.xlu0 %203, %v130
    %v205 = vpop.permute.xlu0 %204
    %207 = vset.pattern.permute.xlu0 1
    %208 = vperm.xlu0 %207, %v131
    %v209 = vpop.permute.xlu0 %208
    %211 = vset.pattern.permute.xlu0 1
    %212 = vperm.xlu0 %211, %v132
    %v213 = vpop.permute.xlu0 %212
    %v215 = vperm.slane %v133, 1
    %v216 = vperm.slane %v133, 3
    %v217 = vperm.slane %v133, 5
    %v218 = vperm.slane %v133, 7
    %v223 = vperm.slane %v215, 1
    %v224 = vperm.slane %v216, 1
    %v225 = vperm.slane %v217, 1
    %v226 = vperm.slane %v218, 1
    %v227 = vmul.f32 %v201, %v223
    %v228 = vmul.f32 %v201, %v224
    %v229 = vmul.f32 %v201, %v225
    %v230 = vmul.f32 %v201, %v226
    %v231 = vmul.f32 %v205, %v223
    %v232 = vmul.f32 %v205, %v224
    %v233 = vmul.f32 %v205, %v225
    %v234 = vmul.f32 %v205, %v226
    %v235 = vmul.f32 %v209, %v223
    %v236 = vmul.f32 %v209, %v224
    %v237 = vmul.f32 %v209, %v225
    %v238 = vmul.f32 %v209, %v226
    %v239 = vmul.f32 %v213, %v223
    %v240 = vmul.f32 %v213, %v224
    %v241 = vmul.f32 %v213, %v225
    %v242 = vmul.f32 %v213, %v226
    %v243 = vadd.f32 %v183, %v227
    %v244 = vadd.f32 %v184, %v228
    %v245 = vadd.f32 %v185, %v229
    %v246 = vadd.f32 %v186, %v230
    %v247 = vadd.f32 %v187, %v231
    %v248 = vadd.f32 %v188, %v232
    %v249 = vadd.f32 %v189, %v233
    %v250 = vadd.f32 %v190, %v234
    %v251 = vadd.f32 %v191, %v235
    %v252 = vadd.f32 %v192, %v236
    %v253 = vadd.f32 %v193, %v237
    %v254 = vadd.f32 %v194, %v238
    %v255 = vadd.f32 %v195, %v239
    %v256 = vadd.f32 %v196, %v240
    %v257 = vadd.f32 %v197, %v241
    %v258 = vadd.f32 %v198, %v242
    %260 = vset.pattern.permute.xlu0 0
    %261 = vperm.xlu0 %260, %v79
    %v262 = vpop.permute.xlu0 %261
    %265 = vset.pattern.permute.xlu0 0
    %266 = vperm.xlu0 %265, %v80
    %v267 = vpop.permute.xlu0 %266
    %270 = vset.pattern.permute.xlu0 0
    %271 = vperm.xlu0 %270, %v81
    %v272 = vpop.permute.xlu0 %271
    %275 = vset.pattern.permute.xlu0 0
    %276 = vperm.xlu0 %275, %v82
    %v277 = vpop.permute.xlu0 %276
    %v279 = vadd.f32 %v243, %v262
    %v280 = vadd.f32 %v244, %v262
    %v281 = vadd.f32 %v245, %v262
    %v282 = vadd.f32 %v246, %v262
    %v283 = vadd.f32 %v247, %v267
    %v284 = vadd.f32 %v248, %v267
    %v285 = vadd.f32 %v249, %v267
    %v286 = vadd.f32 %v250, %v267
    %v287 = vadd.f32 %v251, %v272
    %v288 = vadd.f32 %v252, %v272
    %v289 = vadd.f32 %v253, %v272
    %v290 = vadd.f32 %v254, %v272
    %v291 = vadd.f32 %v255, %v277
    %v292 = vadd.f32 %v256, %v277
    %v293 = vadd.f32 %v257, %v277
    %v294 = vadd.f32 %v258, %v277
    %v295 = vmul.f32 %v279, 0.2
    %v296 = vmul.f32 %v280, 0.2
    %v297 = vmul.f32 %v281, 0.2
    %v298 = vmul.f32 %v282, 0.2
    %v299 = vmul.f32 %v283, 0.2
    %v300 = vmul.f32 %v284, 0.2
    %v301 = vmul.f32 %v285, 0.2
    %v302 = vmul.f32 %v286, 0.2
    %v303 = vmul.f32 %v287, 0.2
    %v304 = vmul.f32 %v288, 0.2
    %v305 = vmul.f32 %v289, 0.2
    %v306 = vmul.f32 %v290, 0.2
    %v307 = vmul.f32 %v291, 0.2
    %v308 = vmul.f32 %v292, 0.2
    %v309 = vmul.f32 %v293, 0.2
    %v310 = vmul.f32 %v294, 0.2
    %v311 = vmax.f32 %v279, %v295
    %v312 = vmax.f32 %v280, %v296
    %v313 = vmax.f32 %v281, %v297
    %v314 = vmax.f32 %v282, %v298
    %v315 = vmax.f32 %v283, %v299
    %v316 = vmax.f32 %v284, %v300
    %v317 = vmax.f32 %v285, %v301
    %v318 = vmax.f32 %v286, %v302
    %v319 = vmax.f32 %v287, %v303
    %v320 = vmax.f32 %v288, %v304
    %v321 = vmax.f32 %v289, %v305
    %v322 = vmax.f32 %v290, %v306
    %v323 = vmax.f32 %v291, %v307
    %v324 = vmax.f32 %v292, %v308
    %v325 = vmax.f32 %v293, %v309
    %v326 = vmax.f32 %v294, %v310
    %v327 = vld [vmem:[%s6] sm:$0xf]
    %v328 = vld [vmem:[%s6 + $0x4] sm:$0xf]
    %v329 = vld [vmem:[%s6 + $0x8] sm:$0xf]
    %v330 = vld [vmem:[%s6 + $0xc] sm:$0xf]
    %v331 = vld [vmem:[%s8] sm:$0xff]
    %v332 = vld [vmem:[%s8 + $0x8] sm:$0xff]
    %v333 = vld [vmem:[%s8 + $0x10] sm:$0xff]
    %v334 = vld [vmem:[%s8 + $0x18] sm:$0xff]
    %v335 = vpack.c.bf16 %v315, %v311
    %v336 = vpack.c.bf16 %v316, %v312
    %v337 = vpack.c.bf16 %v317, %v313
    %v338 = vpack.c.bf16 %v318, %v314
    %v339 = vpack.c.bf16 %v323, %v319
    %v340 = vpack.c.bf16 %v324, %v320
    %v341 = vpack.c.bf16 %v325, %v321
    %v342 = vpack.c.bf16 %v326, %v322
    %v343 = vld [vmem:[%s5] sm:$0xf]
    %v344 = vld [vmem:[%s7] sm:$0xff]
    %v345 = vld [vmem:[%s7 + $0x8] sm:$0xff]
    %v346 = vld [vmem:[%s7 + $0x10] sm:$0xff]
    %v347 = vld [vmem:[%s7 + $0x18] sm:$0xff]
    %v348 = vunpack.c.l.bf16 %v343
    %350 = vset.pattern.permute.xlu0 0
    %351 = vperm.xlu0 %350, %v344
    %v352 = vpop.permute.xlu0 %351
    %355 = vset.pattern.permute.xlu0 0
    %356 = vperm.xlu0 %355, %v345
    %v357 = vpop.permute.xlu0 %356
    %360 = vset.pattern.permute.xlu0 0
    %361 = vperm.xlu0 %360, %v346
    %v362 = vpop.permute.xlu0 %361
    %365 = vset.pattern.permute.xlu0 0
    %366 = vperm.xlu0 %365, %v347
    %v367 = vpop.permute.xlu0 %366
    %v370 = vperm.slane %v348, 0
    %v371 = vperm.slane %v348, 2
    %v372 = vperm.slane %v348, 4
    %v373 = vperm.slane %v348, 6
    %v378 = vperm.slane %v370, 0
    %v379 = vperm.slane %v371, 0
    %v380 = vperm.slane %v372, 0
    %v381 = vperm.slane %v373, 0
    %v382 = vmul.f32 %v352, %v378
    %v383 = vmul.f32 %v352, %v379
    %v384 = vmul.f32 %v352, %v380
    %v385 = vmul.f32 %v352, %v381
    %v386 = vmul.f32 %v357, %v378
    %v387 = vmul.f32 %v357, %v379
    %v388 = vmul.f32 %v357, %v380
    %v389 = vmul.f32 %v357, %v381
    %v390 = vmul.f32 %v362, %v378
    %v391 = vmul.f32 %v362, %v379
    %v392 = vmul.f32 %v362, %v380
    %v393 = vmul.f32 %v362, %v381
    %v394 = vmul.f32 %v367, %v378
    %v395 = vmul.f32 %v367, %v379
    %v396 = vmul.f32 %v367, %v380
    %v397 = vmul.f32 %v367, %v381
    %v402 = vunpack.c.l.b16 %v327
    %v403 = vunpack.c.l.b16 %v328
    %v404 = vunpack.c.l.b16 %v329
    %v405 = vunpack.c.l.b16 %v330
    %v406 = vpack.c.b16 %v403, %v402
    %v407 = vpack.c.b16 %v405, %v404
    %vm408 = vcmask 261120
    %v410 = vsel %vm408, %v406, 0
    %v413 = vsel %vm408, %v407, 0
    %415 = vmatpush.bf16.msra.mxu0 0
    %416 = vmatpush.bf16.msra.mxu0 0
    %417 = vmatpush.bf16.msra.mxu0 0
    %418 = vmatpush.bf16.msra.mxu0 0
    %419 = vmatpush.bf16.msra.mxu0 0
    %420 = vmatpush.bf16.msra.mxu0 0
    %421 = vmatpush.bf16.msra.mxu0 %v339
    %422 = vmatpush.bf16.msra.mxu0 %v335
    %423 = vmatmul.bf16.gmra.mxu0 %v410
    %v424 = vpop.f32.mrf.mxu0
    %v425 = vadd.f32 %v382, %v424
    %v426 = vpop.f32.mrf.mxu0
    %v427 = vadd.f32 %v386, %v426
    %428 = vmatmul.bf16.gmra.mxu0 %v413
    %v429 = vpop.f32.mrf.mxu0
    %v430 = vadd.f32 %v390, %v429
    %v431 = vpop.f32.mrf.mxu0
    %v432 = vadd.f32 %v394, %v431
    %433 = vdwg.mxu0
    %434 = vmatpush.bf16.msra.mxu0 0
    %435 = vmatpush.bf16.msra.mxu0 0
    %436 = vmatpush.bf16.msra.mxu0 0
    %437 = vmatpush.bf16.msra.mxu0 0
    %438 = vmatpush.bf16.msra.mxu0 0
    %439 = vmatpush.bf16.msra.mxu0 0
    %440 = vmatpush.bf16.msra.mxu0 %v340
    %441 = vmatpush.bf16.msra.mxu0 %v336
    %442 = vmatmul.bf16.gmra.mxu0 %v410
    %v443 = vpop.f32.mrf.mxu0
    %v444 = vadd.f32 %v383, %v443
    %v445 = vpop.f32.mrf.mxu0
    %v446 = vadd.f32 %v387, %v445
    %447 = vmatmul.bf16.gmra.mxu0 %v413
    %v448 = vpop.f32.mrf.mxu0
    %v449 = vadd.f32 %v391, %v448
    %v450 = vpop.f32.mrf.mxu0
    %v451 = vadd.f32 %v395, %v450
    %452 = vdwg.mxu0
    %453 = vmatpush.bf16.msra.mxu0 0
    %454 = vmatpush.bf16.msra.mxu0 0
    %455 = vmatpush.bf16.msra.mxu0 0
    %456 = vmatpush.bf16.msra.mxu0 0
    %457 = vmatpush.bf16.msra.mxu0 0
    %458 = vmatpush.bf16.msra.mxu0 0
    %459 = vmatpush.bf16.msra.mxu0 %v341
    %460 = vmatpush.bf16.msra.mxu0 %v337
    %461 = vmatmul.bf16.gmra.mxu0 %v410
    %v462 = vpop.f32.mrf.mxu0
    %v463 = vadd.f32 %v384, %v462
    %v464 = vpop.f32.mrf.mxu0
    %v465 = vadd.f32 %v388, %v464
    %466 = vmatmul.bf16.gmra.mxu0 %v413
    %v467 = vpop.f32.mrf.mxu0
    %v468 = vadd.f32 %v392, %v467
    %v469 = vpop.f32.mrf.mxu0
    %v470 = vadd.f32 %v396, %v469
    %471 = vdwg.mxu0
    %472 = vmatpush.bf16.msra.mxu0 0
    %473 = vmatpush.bf16.msra.mxu0 0
    %474 = vmatpush.bf16.msra.mxu0 0
    %475 = vmatpush.bf16.msra.mxu0 0
    %476 = vmatpush.bf16.msra.mxu0 0
    %477 = vmatpush.bf16.msra.mxu0 0
    %478 = vmatpush.bf16.msra.mxu0 %v342
    %479 = vmatpush.bf16.msra.mxu0 %v338
    %480 = vmatmul.bf16.gmra.mxu0 %v410
    %v481 = vpop.f32.mrf.mxu0
    %v482 = vadd.f32 %v385, %v481
    %v483 = vpop.f32.mrf.mxu0
    %v484 = vadd.f32 %v389, %v483
    %485 = vmatmul.bf16.gmra.mxu0 %v413
    %v486 = vpop.f32.mrf.mxu0
    %v487 = vadd.f32 %v393, %v486
    %v488 = vpop.f32.mrf.mxu0
    %v489 = vadd.f32 %v397, %v488
    %490 = vdwg.mxu0
    %491 = vset.pattern.permute.xlu0 1
    %492 = vperm.xlu0 %491, %v344
    %v493 = vpop.permute.xlu0 %492
    %495 = vset.pattern.permute.xlu0 1
    %496 = vperm.xlu0 %495, %v345
    %v497 = vpop.permute.xlu0 %496
    %499 = vset.pattern.permute.xlu0 1
    %500 = vperm.xlu0 %499, %v346
    %v501 = vpop.permute.xlu0 %500
    %503 = vset.pattern.permute.xlu0 1
    %504 = vperm.xlu0 %503, %v347
    %v505 = vpop.permute.xlu0 %504
    %v507 = vperm.slane %v348, 1
    %v508 = vperm.slane %v348, 3
    %v509 = vperm.slane %v348, 5
    %v510 = vperm.slane %v348, 7
    %v515 = vperm.slane %v507, 1
    %v516 = vperm.slane %v508, 1
    %v517 = vperm.slane %v509, 1
    %v518 = vperm.slane %v510, 1
    %v519 = vmul.f32 %v493, %v515
    %v520 = vmul.f32 %v493, %v516
    %v521 = vmul.f32 %v493, %v517
    %v522 = vmul.f32 %v493, %v518
    %v523 = vmul.f32 %v497, %v515
    %v524 = vmul.f32 %v497, %v516
    %v525 = vmul.f32 %v497, %v517
    %v526 = vmul.f32 %v497, %v518
    %v527 = vmul.f32 %v501, %v515
    %v528 = vmul.f32 %v501, %v516
    %v529 = vmul.f32 %v501, %v517
    %v530 = vmul.f32 %v501, %v518
    %v531 = vmul.f32 %v505, %v515
    %v532 = vmul.f32 %v505, %v516
    %v533 = vmul.f32 %v505, %v517
    %v534 = vmul.f32 %v505, %v518
    %v535 = vadd.f32 %v425, %v519
    %v536 = vadd.f32 %v444, %v520
    %v537 = vadd.f32 %v463, %v521
    %v538 = vadd.f32 %v482, %v522
    %v539 = vadd.f32 %v427, %v523
    %v540 = vadd.f32 %v446, %v524
    %v541 = vadd.f32 %v465, %v525
    %v542 = vadd.f32 %v484, %v526
    %v543 = vadd.f32 %v430, %v527
    %v544 = vadd.f32 %v449, %v528
    %v545 = vadd.f32 %v468, %v529
    %v546 = vadd.f32 %v487, %v530
    %v547 = vadd.f32 %v432, %v531
    %v548 = vadd.f32 %v451, %v532
    %v549 = vadd.f32 %v470, %v533
    %v550 = vadd.f32 %v489, %v534
    %552 = vset.pattern.permute.xlu0 0
    %553 = vperm.xlu0 %552, %v331
    %v554 = vpop.permute.xlu0 %553
    %557 = vset.pattern.permute.xlu0 0
    %558 = vperm.xlu0 %557, %v332
    %v559 = vpop.permute.xlu0 %558
    %562 = vset.pattern.permute.xlu0 0
    %563 = vperm.xlu0 %562, %v333
    %v564 = vpop.permute.xlu0 %563
    %567 = vset.pattern.permute.xlu0 0
    %568 = vperm.xlu0 %567, %v334
    %v569 = vpop.permute.xlu0 %568
    %v571 = vadd.f32 %v535, %v554
    %v572 = vadd.f32 %v536, %v554
    %v573 = vadd.f32 %v537, %v554
    %v574 = vadd.f32 %v538, %v554
    %v575 = vadd.f32 %v539, %v559
    %v576 = vadd.f32 %v540, %v559
    %v577 = vadd.f32 %v541, %v559
    %v578 = vadd.f32 %v542, %v559
    %v579 = vadd.f32 %v543, %v564
    %v580 = vadd.f32 %v544, %v564
    %v581 = vadd.f32 %v545, %v564
    %v582 = vadd.f32 %v546, %v564
    %v583 = vadd.f32 %v547, %v569
    %v584 = vadd.f32 %v548, %v569
    %v585 = vadd.f32 %v549, %v569
    %v586 = vadd.f32 %v550, %v569
    %v587 = vmul.f32 %v571, 0.2
    %v588 = vmul.f32 %v572, 0.2
    %v589 = vmul.f32 %v573, 0.2
    %v590 = vmul.f32 %v574, 0.2
    %v591 = vmul.f32 %v575, 0.2
    %v592 = vmul.f32 %v576, 0.2
    %v593 = vmul.f32 %v577, 0.2
    %v594 = vmul.f32 %v578, 0.2
    %v595 = vmul.f32 %v579, 0.2
    %v596 = vmul.f32 %v580, 0.2
    %v597 = vmul.f32 %v581, 0.2
    %v598 = vmul.f32 %v582, 0.2
    %v599 = vmul.f32 %v583, 0.2
    %v600 = vmul.f32 %v584, 0.2
    %v601 = vmul.f32 %v585, 0.2
    %v602 = vmul.f32 %v586, 0.2
    %v603 = vmax.f32 %v571, %v587
    %v604 = vmax.f32 %v572, %v588
    %v605 = vmax.f32 %v573, %v589
    %v606 = vmax.f32 %v574, %v590
    %v607 = vmax.f32 %v575, %v591
    %v608 = vmax.f32 %v576, %v592
    %v609 = vmax.f32 %v577, %v593
    %v610 = vmax.f32 %v578, %v594
    %v611 = vmax.f32 %v579, %v595
    %v612 = vmax.f32 %v580, %v596
    %v613 = vmax.f32 %v581, %v597
    %v614 = vmax.f32 %v582, %v598
    %v615 = vmax.f32 %v583, %v599
    %v616 = vmax.f32 %v584, %v600
    %v617 = vmax.f32 %v585, %v601
    %v618 = vmax.f32 %v586, %v602
    %v619 = vld [vmem:[%s10] sm:$0xf]
    %v620 = vld [vmem:[%s10 + $0x4] sm:$0xf]
    %v621 = vld [vmem:[%s10 + $0x8] sm:$0xf]
    %v622 = vld [vmem:[%s10 + $0xc] sm:$0xf]
    %v623 = vld [vmem:[%s12] sm:$0xff]
    %v624 = vld [vmem:[%s12 + $0x8] sm:$0xff]
    %v625 = vld [vmem:[%s12 + $0x10] sm:$0xff]
    %v626 = vld [vmem:[%s12 + $0x18] sm:$0xff]
    %v627 = vpack.c.bf16 %v607, %v603
    %v628 = vpack.c.bf16 %v608, %v604
    %v629 = vpack.c.bf16 %v609, %v605
    %v630 = vpack.c.bf16 %v610, %v606
    %v631 = vpack.c.bf16 %v615, %v611
    %v632 = vpack.c.bf16 %v616, %v612
    %v633 = vpack.c.bf16 %v617, %v613
    %v634 = vpack.c.bf16 %v618, %v614
    %v635 = vld [vmem:[%s9] sm:$0xf]
    %v636 = vld [vmem:[%s11] sm:$0xff]
    %v637 = vld [vmem:[%s11 + $0x8] sm:$0xff]
    %v638 = vld [vmem:[%s11 + $0x10] sm:$0xff]
    %v639 = vld [vmem:[%s11 + $0x18] sm:$0xff]
    %v640 = vunpack.c.l.bf16 %v635
    %642 = vset.pattern.permute.xlu0 0
    %643 = vperm.xlu0 %642, %v636
    %v644 = vpop.permute.xlu0 %643
    %647 = vset.pattern.permute.xlu0 0
    %648 = vperm.xlu0 %647, %v637
    %v649 = vpop.permute.xlu0 %648
    %652 = vset.pattern.permute.xlu0 0
    %653 = vperm.xlu0 %652, %v638
    %v654 = vpop.permute.xlu0 %653
    %657 = vset.pattern.permute.xlu0 0
    %658 = vperm.xlu0 %657, %v639
    %v659 = vpop.permute.xlu0 %658
    %v662 = vperm.slane %v640, 0
    %v663 = vperm.slane %v640, 2
    %v664 = vperm.slane %v640, 4
    %v665 = vperm.slane %v640, 6
    %v670 = vperm.slane %v662, 0
    %v671 = vperm.slane %v663, 0
    %v672 = vperm.slane %v664, 0
    %v673 = vperm.slane %v665, 0
    %v674 = vmul.f32 %v644, %v670
    %v675 = vmul.f32 %v644, %v671
    %v676 = vmul.f32 %v644, %v672
    %v677 = vmul.f32 %v644, %v673
    %v678 = vmul.f32 %v649, %v670
    %v679 = vmul.f32 %v649, %v671
    %v680 = vmul.f32 %v649, %v672
    %v681 = vmul.f32 %v649, %v673
    %v682 = vmul.f32 %v654, %v670
    %v683 = vmul.f32 %v654, %v671
    %v684 = vmul.f32 %v654, %v672
    %v685 = vmul.f32 %v654, %v673
    %v686 = vmul.f32 %v659, %v670
    %v687 = vmul.f32 %v659, %v671
    %v688 = vmul.f32 %v659, %v672
    %v689 = vmul.f32 %v659, %v673
    %v694 = vunpack.c.l.b16 %v619
    %v695 = vunpack.c.l.b16 %v620
    %v696 = vunpack.c.l.b16 %v621
    %v697 = vunpack.c.l.b16 %v622
    %v698 = vpack.c.b16 %v695, %v694
    %v699 = vpack.c.b16 %v697, %v696
    %v701 = vsel %vm408, %v698, 0
    %v704 = vsel %vm408, %v699, 0
    %706 = vmatpush.bf16.msra.mxu0 0
    %707 = vmatpush.bf16.msra.mxu0 0
    %708 = vmatpush.bf16.msra.mxu0 0
    %709 = vmatpush.bf16.msra.mxu0 0
    %710 = vmatpush.bf16.msra.mxu0 0
    %711 = vmatpush.bf16.msra.mxu0 0
    %712 = vmatpush.bf16.msra.mxu0 %v631
    %713 = vmatpush.bf16.msra.mxu0 %v627
    %714 = vmatmul.bf16.gmra.mxu0 %v701
    %v715 = vpop.f32.mrf.mxu0
    %v716 = vadd.f32 %v674, %v715
    %v717 = vpop.f32.mrf.mxu0
    %v718 = vadd.f32 %v678, %v717
    %719 = vmatmul.bf16.gmra.mxu0 %v704
    %v720 = vpop.f32.mrf.mxu0
    %v721 = vadd.f32 %v682, %v720
    %v722 = vpop.f32.mrf.mxu0
    %v723 = vadd.f32 %v686, %v722
    %724 = vdwg.mxu0
    %725 = vmatpush.bf16.msra.mxu0 0
    %726 = vmatpush.bf16.msra.mxu0 0
    %727 = vmatpush.bf16.msra.mxu0 0
    %728 = vmatpush.bf16.msra.mxu0 0
    %729 = vmatpush.bf16.msra.mxu0 0
    %730 = vmatpush.bf16.msra.mxu0 0
    %731 = vmatpush.bf16.msra.mxu0 %v632
    %732 = vmatpush.bf16.msra.mxu0 %v628
    %733 = vmatmul.bf16.gmra.mxu0 %v701
    %v734 = vpop.f32.mrf.mxu0
    %v735 = vadd.f32 %v675, %v734
    %v736 = vpop.f32.mrf.mxu0
    %v737 = vadd.f32 %v679, %v736
    %738 = vmatmul.bf16.gmra.mxu0 %v704
    %v739 = vpop.f32.mrf.mxu0
    %v740 = vadd.f32 %v683, %v739
    %v741 = vpop.f32.mrf.mxu0
    %v742 = vadd.f32 %v687, %v741
    %743 = vdwg.mxu0
    %744 = vmatpush.bf16.msra.mxu0 0
    %745 = vmatpush.bf16.msra.mxu0 0
    %746 = vmatpush.bf16.msra.mxu0 0
    %747 = vmatpush.bf16.msra.mxu0 0
    %748 = vmatpush.bf16.msra.mxu0 0
    %749 = vmatpush.bf16.msra.mxu0 0
    %750 = vmatpush.bf16.msra.mxu0 %v633
    %751 = vmatpush.bf16.msra.mxu0 %v629
    %752 = vmatmul.bf16.gmra.mxu0 %v701
    %v753 = vpop.f32.mrf.mxu0
    %v754 = vadd.f32 %v676, %v753
    %v755 = vpop.f32.mrf.mxu0
    %v756 = vadd.f32 %v680, %v755
    %757 = vmatmul.bf16.gmra.mxu0 %v704
    %v758 = vpop.f32.mrf.mxu0
    %v759 = vadd.f32 %v684, %v758
    %v760 = vpop.f32.mrf.mxu0
    %v761 = vadd.f32 %v688, %v760
    %762 = vdwg.mxu0
    %763 = vmatpush.bf16.msra.mxu0 0
    %764 = vmatpush.bf16.msra.mxu0 0
    %765 = vmatpush.bf16.msra.mxu0 0
    %766 = vmatpush.bf16.msra.mxu0 0
    %767 = vmatpush.bf16.msra.mxu0 0
    %768 = vmatpush.bf16.msra.mxu0 0
    %769 = vmatpush.bf16.msra.mxu0 %v634
    %770 = vmatpush.bf16.msra.mxu0 %v630
    %771 = vmatmul.bf16.gmra.mxu0 %v701
    %v772 = vpop.f32.mrf.mxu0
    %v773 = vadd.f32 %v677, %v772
    %v774 = vpop.f32.mrf.mxu0
    %v775 = vadd.f32 %v681, %v774
    %776 = vmatmul.bf16.gmra.mxu0 %v704
    %v777 = vpop.f32.mrf.mxu0
    %v778 = vadd.f32 %v685, %v777
    %v779 = vpop.f32.mrf.mxu0
    %v780 = vadd.f32 %v689, %v779
    %781 = vdwg.mxu0
    %782 = vset.pattern.permute.xlu0 1
    %783 = vperm.xlu0 %782, %v636
    %v784 = vpop.permute.xlu0 %783
    %786 = vset.pattern.permute.xlu0 1
    %787 = vperm.xlu0 %786, %v637
    %v788 = vpop.permute.xlu0 %787
    %790 = vset.pattern.permute.xlu0 1
    %791 = vperm.xlu0 %790, %v638
    %v792 = vpop.permute.xlu0 %791
    %794 = vset.pattern.permute.xlu0 1
    %795 = vperm.xlu0 %794, %v639
    %v796 = vpop.permute.xlu0 %795
    %v798 = vperm.slane %v640, 1
    %v799 = vperm.slane %v640, 3
    %v800 = vperm.slane %v640, 5
    %v801 = vperm.slane %v640, 7
    %v806 = vperm.slane %v798, 1
    %v807 = vperm.slane %v799, 1
    %v808 = vperm.slane %v800, 1
    %v809 = vperm.slane %v801, 1
    %v810 = vmul.f32 %v784, %v806
    %v811 = vmul.f32 %v784, %v807
    %v812 = vmul.f32 %v784, %v808
    %v813 = vmul.f32 %v784, %v809
    %v814 = vmul.f32 %v788, %v806
    %v815 = vmul.f32 %v788, %v807
    %v816 = vmul.f32 %v788, %v808
    %v817 = vmul.f32 %v788, %v809
    %v818 = vmul.f32 %v792, %v806
    %v819 = vmul.f32 %v792, %v807
    %v820 = vmul.f32 %v792, %v808
    %v821 = vmul.f32 %v792, %v809
    %v822 = vmul.f32 %v796, %v806
    %v823 = vmul.f32 %v796, %v807
    %v824 = vmul.f32 %v796, %v808
    %v825 = vmul.f32 %v796, %v809
    %v826 = vadd.f32 %v716, %v810
    %v827 = vadd.f32 %v735, %v811
    %v828 = vadd.f32 %v754, %v812
    %v829 = vadd.f32 %v773, %v813
    %v830 = vadd.f32 %v718, %v814
    %v831 = vadd.f32 %v737, %v815
    %v832 = vadd.f32 %v756, %v816
    %v833 = vadd.f32 %v775, %v817
    %v834 = vadd.f32 %v721, %v818
    %v835 = vadd.f32 %v740, %v819
    %v836 = vadd.f32 %v759, %v820
    %v837 = vadd.f32 %v778, %v821
    %v838 = vadd.f32 %v723, %v822
    %v839 = vadd.f32 %v742, %v823
    %v840 = vadd.f32 %v761, %v824
    %v841 = vadd.f32 %v780, %v825
    %843 = vset.pattern.permute.xlu0 0
    %844 = vperm.xlu0 %843, %v623
    %v845 = vpop.permute.xlu0 %844
    %848 = vset.pattern.permute.xlu0 0
    %849 = vperm.xlu0 %848, %v624
    %v850 = vpop.permute.xlu0 %849
    %853 = vset.pattern.permute.xlu0 0
    %854 = vperm.xlu0 %853, %v625
    %v855 = vpop.permute.xlu0 %854
    %858 = vset.pattern.permute.xlu0 0
    %859 = vperm.xlu0 %858, %v626
    %v860 = vpop.permute.xlu0 %859
    %v862 = vadd.f32 %v826, %v845
    %v863 = vadd.f32 %v827, %v845
    %v864 = vadd.f32 %v828, %v845
    %v865 = vadd.f32 %v829, %v845
    %v866 = vadd.f32 %v830, %v850
    %v867 = vadd.f32 %v831, %v850
    %v868 = vadd.f32 %v832, %v850
    %v869 = vadd.f32 %v833, %v850
    %v870 = vadd.f32 %v834, %v855
    %v871 = vadd.f32 %v835, %v855
    %v872 = vadd.f32 %v836, %v855
    %v873 = vadd.f32 %v837, %v855
    %v874 = vadd.f32 %v838, %v860
    %v875 = vadd.f32 %v839, %v860
    %v876 = vadd.f32 %v840, %v860
    %v877 = vadd.f32 %v841, %v860
    %v878 = vmul.f32 %v862, 0.2
    %v879 = vmul.f32 %v863, 0.2
    %v880 = vmul.f32 %v864, 0.2
    %v881 = vmul.f32 %v865, 0.2
    %v882 = vmul.f32 %v866, 0.2
    %v883 = vmul.f32 %v867, 0.2
    %v884 = vmul.f32 %v868, 0.2
    %v885 = vmul.f32 %v869, 0.2
    %v886 = vmul.f32 %v870, 0.2
    %v887 = vmul.f32 %v871, 0.2
    %v888 = vmul.f32 %v872, 0.2
    %v889 = vmul.f32 %v873, 0.2
    %v890 = vmul.f32 %v874, 0.2
    %v891 = vmul.f32 %v875, 0.2
    %v892 = vmul.f32 %v876, 0.2
    %v893 = vmul.f32 %v877, 0.2
    %v894 = vmax.f32 %v862, %v878
    %v895 = vmax.f32 %v863, %v879
    %v896 = vmax.f32 %v864, %v880
    %v897 = vmax.f32 %v865, %v881
    %v898 = vmax.f32 %v866, %v882
    %v899 = vmax.f32 %v867, %v883
    %v900 = vmax.f32 %v868, %v884
    %v901 = vmax.f32 %v869, %v885
    %v902 = vmax.f32 %v870, %v886
    %v903 = vmax.f32 %v871, %v887
    %v904 = vmax.f32 %v872, %v888
    %v905 = vmax.f32 %v873, %v889
    %v906 = vmax.f32 %v874, %v890
    %v907 = vmax.f32 %v875, %v891
    %v908 = vmax.f32 %v876, %v892
    %v909 = vmax.f32 %v877, %v893
    %v910 = vld [vmem:[%s14] sm:$0xf]
    %v911 = vld [vmem:[%s14 + $0x4] sm:$0xf]
    %v912 = vld [vmem:[%s14 + $0x8] sm:$0xf]
    %v913 = vld [vmem:[%s14 + $0xc] sm:$0xf]
    %v914 = vld [vmem:[%s16] sm:$0xff]
    %v915 = vld [vmem:[%s16 + $0x8] sm:$0xff]
    %v916 = vld [vmem:[%s16 + $0x10] sm:$0xff]
    %v917 = vld [vmem:[%s16 + $0x18] sm:$0xff]
    %v918 = vpack.c.bf16 %v898, %v894
    %v919 = vpack.c.bf16 %v899, %v895
    %v920 = vpack.c.bf16 %v900, %v896
    %v921 = vpack.c.bf16 %v901, %v897
    %v922 = vpack.c.bf16 %v906, %v902
    %v923 = vpack.c.bf16 %v907, %v903
    %v924 = vpack.c.bf16 %v908, %v904
    %v925 = vpack.c.bf16 %v909, %v905
    %v926 = vld [vmem:[%s13] sm:$0xf]
    %v927 = vld [vmem:[%s15] sm:$0xff]
    %v928 = vld [vmem:[%s15 + $0x8] sm:$0xff]
    %v929 = vld [vmem:[%s15 + $0x10] sm:$0xff]
    %v930 = vld [vmem:[%s15 + $0x18] sm:$0xff]
    %v931 = vunpack.c.l.bf16 %v926
    %933 = vset.pattern.permute.xlu0 0
    %934 = vperm.xlu0 %933, %v927
    %v935 = vpop.permute.xlu0 %934
    %938 = vset.pattern.permute.xlu0 0
    %939 = vperm.xlu0 %938, %v928
    %v940 = vpop.permute.xlu0 %939
    %943 = vset.pattern.permute.xlu0 0
    %944 = vperm.xlu0 %943, %v929
    %v945 = vpop.permute.xlu0 %944
    %948 = vset.pattern.permute.xlu0 0
    %949 = vperm.xlu0 %948, %v930
    %v950 = vpop.permute.xlu0 %949
    %v953 = vperm.slane %v931, 0
    %v954 = vperm.slane %v931, 2
    %v955 = vperm.slane %v931, 4
    %v956 = vperm.slane %v931, 6
    %v961 = vperm.slane %v953, 0
    %v962 = vperm.slane %v954, 0
    %v963 = vperm.slane %v955, 0
    %v964 = vperm.slane %v956, 0
    %v965 = vmul.f32 %v935, %v961
    %v966 = vmul.f32 %v935, %v962
    %v967 = vmul.f32 %v935, %v963
    %v968 = vmul.f32 %v935, %v964
    %v969 = vmul.f32 %v940, %v961
    %v970 = vmul.f32 %v940, %v962
    %v971 = vmul.f32 %v940, %v963
    %v972 = vmul.f32 %v940, %v964
    %v973 = vmul.f32 %v945, %v961
    %v974 = vmul.f32 %v945, %v962
    %v975 = vmul.f32 %v945, %v963
    %v976 = vmul.f32 %v945, %v964
    %v977 = vmul.f32 %v950, %v961
    %v978 = vmul.f32 %v950, %v962
    %v979 = vmul.f32 %v950, %v963
    %v980 = vmul.f32 %v950, %v964
    %v985 = vunpack.c.l.b16 %v910
    %v986 = vunpack.c.l.b16 %v911
    %v987 = vunpack.c.l.b16 %v912
    %v988 = vunpack.c.l.b16 %v913
    %v989 = vpack.c.b16 %v986, %v985
    %v990 = vpack.c.b16 %v988, %v987
    %v992 = vsel %vm408, %v989, 0
    %v995 = vsel %vm408, %v990, 0
    %997 = vmatpush.bf16.msra.mxu0 0
    %998 = vmatpush.bf16.msra.mxu0 0
    %999 = vmatpush.bf16.msra.mxu0 0
    %1000 = vmatpush.bf16.msra.mxu0 0
    %1001 = vmatpush.bf16.msra.mxu0 0
    %1002 = vmatpush.bf16.msra.mxu0 0
    %1003 = vmatpush.bf16.msra.mxu0 %v922
    %1004 = vmatpush.bf16.msra.mxu0 %v918
    %1005 = vmatmul.bf16.gmra.mxu0 %v992
    %v1006 = vpop.f32.mrf.mxu0
    %v1007 = vadd.f32 %v965, %v1006
    %v1008 = vpop.f32.mrf.mxu0
    %v1009 = vadd.f32 %v969, %v1008
    %1010 = vmatmul.bf16.gmra.mxu0 %v995
    %v1011 = vpop.f32.mrf.mxu0
    %v1012 = vadd.f32 %v973, %v1011
    %v1013 = vpop.f32.mrf.mxu0
    %v1014 = vadd.f32 %v977, %v1013
    %1015 = vdwg.mxu0
    %1016 = vmatpush.bf16.msra.mxu0 0
    %1017 = vmatpush.bf16.msra.mxu0 0
    %1018 = vmatpush.bf16.msra.mxu0 0
    %1019 = vmatpush.bf16.msra.mxu0 0
    %1020 = vmatpush.bf16.msra.mxu0 0
    %1021 = vmatpush.bf16.msra.mxu0 0
    %1022 = vmatpush.bf16.msra.mxu0 %v923
    %1023 = vmatpush.bf16.msra.mxu0 %v919
    %1024 = vmatmul.bf16.gmra.mxu0 %v992
    %v1025 = vpop.f32.mrf.mxu0
    %v1026 = vadd.f32 %v966, %v1025
    %v1027 = vpop.f32.mrf.mxu0
    %v1028 = vadd.f32 %v970, %v1027
    %1029 = vmatmul.bf16.gmra.mxu0 %v995
    %v1030 = vpop.f32.mrf.mxu0
    %v1031 = vadd.f32 %v974, %v1030
    %v1032 = vpop.f32.mrf.mxu0
    %v1033 = vadd.f32 %v978, %v1032
    %1034 = vdwg.mxu0
    %1035 = vmatpush.bf16.msra.mxu0 0
    %1036 = vmatpush.bf16.msra.mxu0 0
    %1037 = vmatpush.bf16.msra.mxu0 0
    %1038 = vmatpush.bf16.msra.mxu0 0
    %1039 = vmatpush.bf16.msra.mxu0 0
    %1040 = vmatpush.bf16.msra.mxu0 0
    %1041 = vmatpush.bf16.msra.mxu0 %v924
    %1042 = vmatpush.bf16.msra.mxu0 %v920
    %1043 = vmatmul.bf16.gmra.mxu0 %v992
    %v1044 = vpop.f32.mrf.mxu0
    %v1045 = vadd.f32 %v967, %v1044
    %v1046 = vpop.f32.mrf.mxu0
    %v1047 = vadd.f32 %v971, %v1046
    %1048 = vmatmul.bf16.gmra.mxu0 %v995
    %v1049 = vpop.f32.mrf.mxu0
    %v1050 = vadd.f32 %v975, %v1049
    %v1051 = vpop.f32.mrf.mxu0
    %v1052 = vadd.f32 %v979, %v1051
    %1053 = vdwg.mxu0
    %1054 = vmatpush.bf16.msra.mxu0 0
    %1055 = vmatpush.bf16.msra.mxu0 0
    %1056 = vmatpush.bf16.msra.mxu0 0
    %1057 = vmatpush.bf16.msra.mxu0 0
    %1058 = vmatpush.bf16.msra.mxu0 0
    %1059 = vmatpush.bf16.msra.mxu0 0
    %1060 = vmatpush.bf16.msra.mxu0 %v925
    %1061 = vmatpush.bf16.msra.mxu0 %v921
    %1062 = vmatmul.bf16.gmra.mxu0 %v992
    %v1063 = vpop.f32.mrf.mxu0
    %v1064 = vadd.f32 %v968, %v1063
    %v1065 = vpop.f32.mrf.mxu0
    %v1066 = vadd.f32 %v972, %v1065
    %1067 = vmatmul.bf16.gmra.mxu0 %v995
    %v1068 = vpop.f32.mrf.mxu0
    %v1069 = vadd.f32 %v976, %v1068
    %v1070 = vpop.f32.mrf.mxu0
    %v1071 = vadd.f32 %v980, %v1070
    %1072 = vdwg.mxu0
    %1074 = vset.pattern.permute.xlu0 0
    %1075 = vperm.xlu0 %1074, %v914
    %v1076 = vpop.permute.xlu0 %1075
    %1079 = vset.pattern.permute.xlu0 0
    %1080 = vperm.xlu0 %1079, %v915
    %v1081 = vpop.permute.xlu0 %1080
    %1084 = vset.pattern.permute.xlu0 0
    %1085 = vperm.xlu0 %1084, %v916
    %v1086 = vpop.permute.xlu0 %1085
    %1089 = vset.pattern.permute.xlu0 0
    %1090 = vperm.xlu0 %1089, %v917
    %v1091 = vpop.permute.xlu0 %1090
    %v1093 = vadd.f32 %v1007, %v1076
    %v1094 = vadd.f32 %v1026, %v1076
    %v1095 = vadd.f32 %v1045, %v1076
    %v1096 = vadd.f32 %v1064, %v1076
    %v1097 = vadd.f32 %v1009, %v1081
    %v1098 = vadd.f32 %v1028, %v1081
    %v1099 = vadd.f32 %v1047, %v1081
    %v1100 = vadd.f32 %v1066, %v1081
    %v1101 = vadd.f32 %v1012, %v1086
    %v1102 = vadd.f32 %v1031, %v1086
    %v1103 = vadd.f32 %v1050, %v1086
    %v1104 = vadd.f32 %v1069, %v1086
    %v1105 = vadd.f32 %v1014, %v1091
    %v1106 = vadd.f32 %v1033, %v1091
    %v1107 = vadd.f32 %v1052, %v1091
    %v1108 = vadd.f32 %v1071, %v1091
    %v1109 = vmul.f32 %v1093, 0.2
    %v1110 = vmul.f32 %v1094, 0.2
    %v1111 = vmul.f32 %v1095, 0.2
    %v1112 = vmul.f32 %v1096, 0.2
    %v1113 = vmul.f32 %v1097, 0.2
    %v1114 = vmul.f32 %v1098, 0.2
    %v1115 = vmul.f32 %v1099, 0.2
    %v1116 = vmul.f32 %v1100, 0.2
    %v1117 = vmul.f32 %v1101, 0.2
    %v1118 = vmul.f32 %v1102, 0.2
    %v1119 = vmul.f32 %v1103, 0.2
    %v1120 = vmul.f32 %v1104, 0.2
    %v1121 = vmul.f32 %v1105, 0.2
    %v1122 = vmul.f32 %v1106, 0.2
    %v1123 = vmul.f32 %v1107, 0.2
    %v1124 = vmul.f32 %v1108, 0.2
    %v1125 = vmax.f32 %v1093, %v1109
    %v1126 = vmax.f32 %v1094, %v1110
    %v1127 = vmax.f32 %v1095, %v1111
    %v1128 = vmax.f32 %v1096, %v1112
    %v1129 = vmax.f32 %v1097, %v1113
    %v1130 = vmax.f32 %v1098, %v1114
    %v1131 = vmax.f32 %v1099, %v1115
    %v1132 = vmax.f32 %v1100, %v1116
    %v1133 = vmax.f32 %v1101, %v1117
    %v1134 = vmax.f32 %v1102, %v1118
    %v1135 = vmax.f32 %v1103, %v1119
    %v1136 = vmax.f32 %v1104, %v1120
    %v1137 = vmax.f32 %v1105, %v1121
    %v1138 = vmax.f32 %v1106, %v1122
    %v1139 = vmax.f32 %v1107, %v1123
    %v1140 = vmax.f32 %v1108, %v1124
    %v1141 = vld [vmem:[%s18] sm:$0xff]
    %v1142 = vld [vmem:[%s18 + $0x8] sm:$0xff]
    %v1143 = vld [vmem:[%s18 + $0x10] sm:$0xff]
    %v1144 = vld [vmem:[%s18 + $0x18] sm:$0xff]
    %v1145 = vld [vmem:[#allocation3] sm:$0x1]
    %1147 = vset.pattern.permute.xlu0 0
    %1148 = vperm.xlu0 %1147, %v1141
    %v1149 = vpop.permute.xlu0 %1148
    %1152 = vset.pattern.permute.xlu0 0
    %1153 = vperm.xlu0 %1152, %v1142
    %v1154 = vpop.permute.xlu0 %1153
    %1157 = vset.pattern.permute.xlu0 0
    %1158 = vperm.xlu0 %1157, %v1143
    %v1159 = vpop.permute.xlu0 %1158
    %1162 = vset.pattern.permute.xlu0 0
    %1163 = vperm.xlu0 %1162, %v1144
    %v1164 = vpop.permute.xlu0 %1163
    %v1166 = vmul.f32 %v1149, %v1125
    %v1167 = vmul.f32 %v1149, %v1126
    %v1168 = vmul.f32 %v1149, %v1127
    %v1169 = vmul.f32 %v1149, %v1128
    %v1170 = vmul.f32 %v1154, %v1129
    %v1171 = vmul.f32 %v1154, %v1130
    %v1172 = vmul.f32 %v1154, %v1131
    %v1173 = vmul.f32 %v1154, %v1132
    %v1174 = vmul.f32 %v1159, %v1133
    %v1175 = vmul.f32 %v1159, %v1134
    %v1176 = vmul.f32 %v1159, %v1135
    %v1177 = vmul.f32 %v1159, %v1136
    %v1178 = vmul.f32 %v1164, %v1137
    %v1179 = vmul.f32 %v1164, %v1138
    %v1180 = vmul.f32 %v1164, %v1139
    %v1181 = vmul.f32 %v1164, %v1140
    %v1182 = vadd.f32 %v1166, %v1170
    %v1183 = vadd.f32 %v1182, %v1174
    %v1184 = vadd.f32 %v1183, %v1178
    %v1185 = vrot.slane %v1184, 4
    %v1186 = vadd.f32 %v1184, %v1185
    %v1187 = vrot.slane %v1186, 2
    %v1188 = vadd.f32 %v1186, %v1187
    %v1189 = vrot.slane %v1188, 1
    %v1190 = vadd.f32 %v1188, %v1189
    %v1191 = vadd.f32 %v1167, %v1171
    %v1192 = vadd.f32 %v1191, %v1175
    %v1193 = vadd.f32 %v1192, %v1179
    %v1194 = vrot.slane %v1193, 4
    %v1195 = vadd.f32 %v1193, %v1194
    %v1196 = vrot.slane %v1195, 2
    %v1197 = vadd.f32 %v1195, %v1196
    %v1198 = vrot.slane %v1197, 1
    %v1199 = vadd.f32 %v1197, %v1198
    %v1200 = vadd.f32 %v1168, %v1172
    %v1201 = vadd.f32 %v1200, %v1176
    %v1202 = vadd.f32 %v1201, %v1180
    %v1203 = vrot.slane %v1202, 4
    %v1204 = vadd.f32 %v1202, %v1203
    %v1205 = vrot.slane %v1204, 2
    %v1206 = vadd.f32 %v1204, %v1205
    %v1207 = vrot.slane %v1206, 1
    %v1208 = vadd.f32 %v1206, %v1207
    %v1209 = vadd.f32 %v1169, %v1173
    %v1210 = vadd.f32 %v1209, %v1177
    %v1211 = vadd.f32 %v1210, %v1181
    %v1212 = vrot.slane %v1211, 4
    %v1213 = vadd.f32 %v1211, %v1212
    %v1214 = vrot.slane %v1213, 2
    %v1215 = vadd.f32 %v1213, %v1214
    %v1216 = vrot.slane %v1215, 1
    %v1217 = vadd.f32 %v1215, %v1216
    %v1218 = vld [vmem:[%s17] sm:$0xf]
    %v1219 = vld [vmem:[#allocation2] sm:$0x1]
    %v1220 = vunpack.c.l.bf16 %v1218
    %1222 = vset.pattern.permute.xlu0 0
    %1223 = vperm.xlu0 %1222, %v1219
    %v1224 = vpop.permute.xlu0 %1223
    %v1226 = vperm.slane %v1224, 0
    %v1227 = vmul.f32 %v1226, %v1220
    %v1229 = vperm.slane %v1227, 0
    %v1230 = vperm.slane %v1227, 2
    %v1231 = vperm.slane %v1227, 4
    %v1232 = vperm.slane %v1227, 6
    %v1237 = vadd.f32 %v1190, %v1229
    %v1238 = vadd.f32 %v1199, %v1230
    %v1239 = vadd.f32 %v1208, %v1231
    %v1240 = vadd.f32 %v1217, %v1232
    %1242 = vset.pattern.permute.xlu0 0
    %1243 = vperm.xlu0 %1242, %v1145
    %v1244 = vpop.permute.xlu0 %1243
    %v1246 = vperm.slane %v1244, 0
    %v1247 = vadd.f32 %v1237, %v1246
    %v1248 = vadd.f32 %v1238, %v1246
    %v1249 = vadd.f32 %v1239, %v1246
    %v1250 = vadd.f32 %v1240, %v1246
    %v1255 = vrot.slane %v1248, 7
    %v1256 = vrot.slane %v1249, 6
    %v1257 = vrot.slane %v1250, 5
    %vm1258 = vcmask 1040384
    %v1259 = vsel %vm1258, %v1247, %v1255
    %vm1260 = vcmask 1042434
    %v1261 = vsel %vm1260, %v1256, %v1257
    %vm1262 = vcmask 1041408
    %v1263 = vsel %vm1262, %v1259, %v1261
    %v1265 = vsub.f32 %v74, %v1263
    %v1266 = vlaneseq
    %vm1267 = vcmp.ge.s32.totalorder %v1266, 0
    %vm1268 = vcmp.lt.s32.totalorder %v1266, 512
    %vm1269 = vmand %vm1267, %vm1268
    %1270 = vst.msk [vmem:[#allocation4] sm:$0xf] %vm1269, %v1265
    // Predicated region
    $region86: #{tpu_custom_call.1} parent=1 // pred_check
      _
    $region87: #{tpu_custom_call.1} parent=1 // pred_check_branch
      %1272 = sbr.rel (0) target = $region89
    $region88: #{tpu_custom_call.1} parent=1 // pred_region
      %1274 = vsyncadd [#allocation5], 0
      %s1276 = sshll.u32 [#allocation4], 4
      %s1277 = int_to_ptr.vmem [resolvable:$true] %s1276
      %s1278 = sshll.u32 %s21, 4
      %s1279 = int_to_ptr.hbm [resolvable:$true] %s1278
      %1281 = dma.vmem_to_hbm [thread:$0]  %s1277, 64, %s1279, [#allocation5]
    $region89: #{tpu_custom_call.1} parent=1 // pred_fallthru
      _
    // Predicated region
    $region90: #{tpu_custom_call.1} parent=1 // pred_check
      _
    $region91: #{tpu_custom_call.1} parent=1 // pred_check_branch
      %1283 = sbr.rel (0) target = $region93
    $region92: #{tpu_custom_call.1} parent=1 // pred_region
      %1285 = dma.done [#allocation5], 64
    $region93: #{tpu_custom_call.1} parent=1 // pred_fallthru
      _
    %1286 = vsyncpa [#allocation5], 1

</llo_original>
